<compile_context>
chip_gen: v7x
topology: tpu7x:2x2x1
jax: 0.10.0
libtpu: 0.0.40
codegen_flags: <defaults>
</compile_context>

<pallas_src>
import jax
import jax.numpy as jnp
from jax import lax
from jax.experimental import pallas as pl
from jax.experimental.pallas import tpu as pltpu


def _bottleneck_kernel(xm_ref, xt_ref, xb_ref,
                       w1_ref, s1_ref, b1_ref,
                       w2_ref, s2_ref, b2_ref,
                       w3_ref, s3_ref, b3_ref,
                       o_ref):
    # xm_ref: (1, TH, W, Cin) bf16   main rows of the tile (also the residual)
    # xt_ref: (1, 1,  W, Cin) bf16   row above the tile (clamped at the border)
    # xb_ref: (1, 1,  W, Cin) bf16   row below the tile (clamped at the border)
    # w1_ref: (Cin, P)  bf16         s1/b1: (1, P)   f32
    # w2_ref: (9P, P)   bf16         s2/b2: (1, P)   f32   (HWIO reshaped)
    # w3_ref: (P, Cin)  bf16         s3/b3: (1, Cin) f32
    # o_ref : (1, TH, W, Cin) f32
    _, TH, W, Cin = xm_ref.shape
    P = w1_ref.shape[1]
    t = pl.program_id(1)
    n_tiles = pl.num_programs(1)

    x_main = xm_ref[0]                                                # (TH, W, Cin)
    x_all = jnp.concatenate([xt_ref[0], x_main, xb_ref[0]], axis=0)   # (TH+2, W, Cin)

    # --- conv1 (1x1) + bn1 + relu  (bf16 MXU operands, f32 accumulate) -----
    t1 = jnp.dot(x_all.reshape((TH + 2) * W, Cin), w1_ref[...],
                 preferred_element_type=jnp.float32)
    t1 = jnp.maximum(t1 * s1_ref[...] + b1_ref[...], 0.0)            # ((TH+2)W, P)
    t1 = t1.reshape(TH + 2, W, P)

    # Halo rows that fall outside the image must contribute ZERO (conv2's
    # padding acts on conv1's *output*), so scale them out on the first/last
    # row tile of the image.
    top_keep = jnp.where(t == 0, 0.0, 1.0).astype(jnp.float32)
    bot_keep = jnp.where(t == n_tiles - 1, 0.0, 1.0).astype(jnp.float32)
    t1 = jnp.concatenate([t1[0:1] * top_keep,
                          t1[1:TH + 1],
                          t1[TH + 1:TH + 2] * bot_keep], axis=0)      # (TH+2, W, P)

    # --- conv2 (3x3, pad=1) as ONE deep-K matmul via im2col -----------------
    zcol = jnp.zeros((TH + 2, 1, P), jnp.float32)
    xl = jnp.concatenate([zcol, t1[:, :W - 1, :]], axis=1)   # col x holds t1[x-1]
    xr = jnp.concatenate([t1[:, 1:, :], zcol], axis=1)       # col x holds t1[x+1]
    slab3 = jnp.concatenate([xl, t1, xr], axis=-1)           # (TH+2, W, 3P): kx=0,1,2
    slab9 = jnp.concatenate([slab3[0:TH],                    # ky = 0
                             slab3[1:TH + 1],                # ky = 1
                             slab3[2:TH + 2]], axis=-1)      # (TH, W, 9P)
    t2 = jnp.dot(slab9.reshape(TH * W, 9 * P).astype(jnp.bfloat16), w2_ref[...],
                 preferred_element_type=jnp.float32)
    t2 = jnp.maximum(t2 * s2_ref[...] + b2_ref[...], 0.0)            # (TH*W, P)

    # --- conv3 (1x1) + bn3 + residual + relu --------------------------------
    t3 = jnp.dot(t2.astype(jnp.bfloat16), w3_ref[...],
                 preferred_element_type=jnp.float32)
    t3 = t3 * s3_ref[...] + b3_ref[...]                              # (TH*W, Cin)
    res = x_main.reshape(TH * W, Cin).astype(jnp.float32)            # cast only here
    out = jnp.maximum(t3 + res, 0.0)
    o_ref[0] = out.reshape(TH, W, Cin).astype(o_ref.dtype)


def bottleneck_pallas(x_nhwc, w1, s1, b1, w2, s2, b2, w3, s3, b3, *, tile_h=8):
    N, H, W, Cin = x_nhwc.shape
    P = w1.shape[1]
    assert Cin == 4 * P, "downsample=None requires inplanes == planes * 4"
    TH = min(tile_h, H)
    assert H % TH == 0, "H must be divisible by the row-tile height"
    T = H // TH

    # bf16 operands for the MXU; BN scale/bias stay f32.
    x_bf = x_nhwc.astype(jnp.bfloat16)
    w1b = w1.astype(jnp.bfloat16)
    # HWIO (3,3,P,P) -> (9P, P); row index = ky*3P + kx*P + cin, matching the
    # in-kernel im2col slab ordering (ky outer, kx inner, channel innermost).
    w2b = w2.reshape(9 * P, P).astype(jnp.bfloat16)
    w3b = w3.astype(jnp.bfloat16)

    def full(a):
        return pl.BlockSpec(a.shape, lambda n, t: (0,) * len(a.shape))

    return pl.pallas_call(
        _bottleneck_kernel,
        out_shape=jax.ShapeDtypeStruct((N, H, W, Cin), jnp.float32),
        grid=(N, T),
        in_specs=[
            # main rows of the tile (also used as the residual)
            pl.BlockSpec((1, TH, W, Cin), lambda n, t: (n, t, 0, 0)),
            # halo row above (clamped at the top border; zeroed in-kernel)
            pl.BlockSpec((1, 1, W, Cin),
                         lambda n, t: (n, jnp.maximum(t * TH - 1, 0), 0, 0)),
            # halo row below (clamped at the bottom border; zeroed in-kernel)
            pl.BlockSpec((1, 1, W, Cin),
                         lambda n, t: (n, jnp.minimum(t * TH + TH, H - 1), 0, 0)),
            full(w1b), full(s1), full(b1),
            full(w2b), full(s2), full(b2),
            full(w3b), full(s3), full(b3),
        ],
        out_specs=pl.BlockSpec((1, TH, W, Cin), lambda n, t: (n, t, 0, 0)),
        compiler_params=pltpu.CompilerParams(
            dimension_semantics=("parallel", "parallel")),
    )(x_bf, x_bf, x_bf, w1b, s1, b1, w2b, s2, b2, w3b, s3, b3)


def _fold_bn(gamma, beta, mean, var, eps=1e-5):
    scale = gamma / jnp.sqrt(var + eps)
    bias = beta - mean * scale
    return scale[None, :], bias[None, :]          # (1, C)


def _ref_forward(x_nhwc, w1, s1, b1, w2, s2, b2, w3, s3, b3):
    t = jnp.einsum('nhwc,cp->nhwp', x_nhwc, w1)
    t = jnp.maximum(t * s1 + b1, 0.0)
    t = lax.conv_general_dilated(t, w2, window_strides=(1, 1),
                                 padding=((1, 1), (1, 1)),
                                 dimension_numbers=('NHWC', 'HWIO', 'NHWC'))
    t = jnp.maximum(t * s2 + b2, 0.0)
    t = jnp.einsum('nhwc,cp->nhwp', t, w3)
    t = t * s3 + b3
    return jnp.maximum(t + x_nhwc, 0.0)


if __name__ == "__main__":
    # Small ResNet-ish shapes: batch=2, planes=32, inplanes=4*32=128, 16x16.
    N, P, H, W = 2, 32, 16, 16
    Cin = 4 * P

    key = jax.random.PRNGKey(0)
    ks = jax.random.split(key, 8)

    # PyTorch-style input is NCHW; the kernel works in NHWC.
    x_nchw = jax.random.normal(ks[0], (N, Cin, H, W), jnp.float32)
    x_nhwc = jnp.transpose(x_nchw, (0, 2, 3, 1))

    # Conv weights (synthetic, deterministic). 1x1 convs stored as (Cin, Cout);
    # the 3x3 conv is stored HWIO = (3, 3, P, P).
    w1 = jax.random.normal(ks[1], (Cin, P), jnp.float32) * 0.1
    w2 = jax.random.normal(ks[2], (3, 3, P, P), jnp.float32) * 0.1
    w3 = jax.random.normal(ks[3], (P, Cin), jnp.float32) * 0.1

    def bn_params(k, c):
        k1, k2, k3, k4 = jax.random.split(k, 4)
        gamma = jax.random.uniform(k1, (c,), jnp.float32, 0.5, 1.5)
        beta = jax.random.normal(k2, (c,), jnp.float32) * 0.1
        mean = jax.random.normal(k3, (c,), jnp.float32) * 0.1
        var = jax.random.uniform(k4, (c,), jnp.float32, 0.5, 1.5)
        return _fold_bn(gamma, beta, mean, var)

    s1, b1 = bn_params(ks[4], P)
    s2, b2 = bn_params(ks[5], P)
    s3, b3 = bn_params(ks[6], Cin)

    out = bottleneck_pallas(x_nhwc, w1, s1, b1, w2, s2, b2, w3, s3, b3, tile_h=8)
    out = jax.block_until_ready(out)

    # Reference in f32 on the same bf16-rounded input/weights: the kernel's
    # only additional error source is bf16 rounding of the two intermediates.
    rnd = lambda a: a.astype(jnp.bfloat16).astype(jnp.float32)
    ref = _ref_forward(rnd(x_nhwc), rnd(w1), s1, b1, rnd(w2), s2, b2,
                       rnd(w3), s3, b3)
    assert out.shape == ref.shape
    assert jnp.allclose(out, ref, atol=7e-2, rtol=2e-2), (
        "mismatch vs reference: max abs diff = %f"
        % float(jnp.max(jnp.abs(out - ref))))

    # Back to PyTorch NCHW layout (shape check only).
    out_nchw = jnp.transpose(out, (0, 3, 1, 2))
    assert out_nchw.shape == (N, Cin, H, W)

    print("KERNEL_OK")
</pallas_src>

<mosaic_0001>
module attributes {stable_mosaic.version = 11 : i64} {
  func.func @_bottleneck_kernel(%arg0: i32, %arg1: i32, %arg2: memref<1x8x16x128xbf16, #tpu.memory_space<vmem>>, %arg3: memref<1x1x16x128xbf16, #tpu.memory_space<vmem>>, %arg4: memref<1x1x16x128xbf16, #tpu.memory_space<vmem>>, %arg5: memref<128x32xbf16, #tpu.memory_space<vmem>>, %arg6: memref<1x32xf32, #tpu.memory_space<vmem>>, %arg7: memref<1x32xf32, #tpu.memory_space<vmem>>, %arg8: memref<288x32xbf16, #tpu.memory_space<vmem>>, %arg9: memref<1x32xf32, #tpu.memory_space<vmem>>, %arg10: memref<1x32xf32, #tpu.memory_space<vmem>>, %arg11: memref<32x128xbf16, #tpu.memory_space<vmem>>, %arg12: memref<1x128xf32, #tpu.memory_space<vmem>>, %arg13: memref<1x128xf32, #tpu.memory_space<vmem>>, %arg14: memref<1x8x16x128xf32, #tpu.memory_space<vmem>>) attributes {dimension_semantics = [#tpu.dimension_semantics<parallel>, #tpu.dimension_semantics<parallel>], iteration_bounds = array<i64: 2, 2>, scalar_prefetch = 0 : i64, scratch_operands = 0 : i64, tpu.core_type = #tpu.core_type<tc>, window_params = [{transform_indices = @transform_0, window_bounds = array<i64: 1, 8, 16, 128>}, {transform_indices = @transform_1, window_bounds = array<i64: 1, 1, 16, 128>}, {transform_indices = @transform_2, window_bounds = array<i64: 1, 1, 16, 128>}, {pipeline_mode = #tpu.pipeline_mode<synchronous>, transform_indices = @transform_3, window_bounds = array<i64: 128, 32>}, {pipeline_mode = #tpu.pipeline_mode<synchronous>, transform_indices = @transform_4, window_bounds = array<i64: 1, 32>}, {pipeline_mode = #tpu.pipeline_mode<synchronous>, transform_indices = @transform_5, window_bounds = array<i64: 1, 32>}, {pipeline_mode = #tpu.pipeline_mode<synchronous>, transform_indices = @transform_6, window_bounds = array<i64: 288, 32>}, {pipeline_mode = #tpu.pipeline_mode<synchronous>, transform_indices = @transform_7, window_bounds = array<i64: 1, 32>}, {pipeline_mode = #tpu.pipeline_mode<synchronous>, transform_indices = @transform_8, window_bounds = array<i64: 1, 32>}, {pipeline_mode = #tpu.pipeline_mode<synchronous>, transform_indices = @transform_9, window_bounds = array<i64: 32, 128>}, {pipeline_mode = #tpu.pipeline_mode<synchronous>, transform_indices = @transform_10, window_bounds = array<i64: 1, 128>}, {pipeline_mode = #tpu.pipeline_mode<synchronous>, transform_indices = @transform_11, window_bounds = array<i64: 1, 128>}, {transform_indices = @transform_12, window_bounds = array<i64: 1, 8, 16, 128>}]} {
    %c0 = arith.constant 0 : index
    %c0_0 = arith.constant 0 : index
    %c0_1 = arith.constant 0 : index
    %c0_2 = arith.constant 0 : index
    %0 = vector.load %arg2[%c0, %c0_0, %c0_1, %c0_2] : memref<1x8x16x128xbf16, #tpu.memory_space<vmem>>, vector<1x8x16x128xbf16>
    %1 = vector.shape_cast %0 : vector<1x8x16x128xbf16> to vector<8x16x128xbf16>
    %c0_3 = arith.constant 0 : index
    %c0_4 = arith.constant 0 : index
    %c0_5 = arith.constant 0 : index
    %c0_6 = arith.constant 0 : index
    %2 = vector.load %arg3[%c0_3, %c0_4, %c0_5, %c0_6] : memref<1x1x16x128xbf16, #tpu.memory_space<vmem>>, vector<1x1x16x128xbf16>
    %3 = vector.shape_cast %2 : vector<1x1x16x128xbf16> to vector<1x16x128xbf16>
    %c0_7 = arith.constant 0 : index
    %c0_8 = arith.constant 0 : index
    %c0_9 = arith.constant 0 : index
    %c0_10 = arith.constant 0 : index
    %4 = vector.load %arg4[%c0_7, %c0_8, %c0_9, %c0_10] : memref<1x1x16x128xbf16, #tpu.memory_space<vmem>>, vector<1x1x16x128xbf16>
    %5 = vector.shape_cast %4 : vector<1x1x16x128xbf16> to vector<1x16x128xbf16>
    %6 = tpu.concatenate %3, %1, %5 in 0 : vector<1x16x128xbf16>, vector<8x16x128xbf16>, vector<1x16x128xbf16> -> vector<10x16x128xbf16>
    %7 = vector.shape_cast %6 : vector<10x16x128xbf16> to vector<160x128xbf16>
    %c0_11 = arith.constant 0 : index
    %c0_12 = arith.constant 0 : index
    %8 = vector.load %arg5[%c0_11, %c0_12] : memref<128x32xbf16, #tpu.memory_space<vmem>>, vector<128x32xbf16>
    %cst = arith.constant dense<0.000000e+00> : vector<160x32xf32>
    %9 = tpu.matmul %7, %8, %cst {dimension_numbers = #tpu.dot_dimension_numbers<[1], [0], [0], [1], [0, 0, 1, 1], [], []>} : vector<160x128xbf16>, vector<128x32xbf16>, vector<160x32xf32> -> vector<160x32xf32>
    %c0_13 = arith.constant 0 : index
    %c0_14 = arith.constant 0 : index
    %10 = vector.load %arg6[%c0_13, %c0_14] : memref<1x32xf32, #tpu.memory_space<vmem>>, vector<1x32xf32>
    %11 = vector.broadcast %10 : vector<1x32xf32> to vector<160x32xf32>
    %12 = arith.mulf %9, %11 : vector<160x32xf32>
    %c0_15 = arith.constant 0 : index
    %c0_16 = arith.constant 0 : index
    %13 = vector.load %arg7[%c0_15, %c0_16] : memref<1x32xf32, #tpu.memory_space<vmem>>, vector<1x32xf32>
    %14 = vector.broadcast %13 : vector<1x32xf32> to vector<160x32xf32>
    %15 = arith.addf %12, %14 : vector<160x32xf32>
    %cst_17 = arith.constant 0.000000e+00 : f32
    %16 = vector.broadcast %cst_17 : f32 to vector<160x32xf32>
    %17 = arith.maximumf %15, %16 : vector<160x32xf32>
    %18 = vector.shape_cast %17 : vector<160x32xf32> to vector<10x16x32xf32>
    %c0_i32 = arith.constant 0 : i32
    %19 = arith.cmpi eq, %arg1, %c0_i32 : i32
    %cst_18 = arith.constant 0.000000e+00 : f32
    %cst_19 = arith.constant 1.000000e+00 : f32
    %20 = arith.select %19, %cst_18, %cst_19 : f32
    %c1_i32 = arith.constant 1 : i32
    %21 = arith.cmpi eq, %arg1, %c1_i32 : i32
    %cst_20 = arith.constant 0.000000e+00 : f32
    %cst_21 = arith.constant 1.000000e+00 : f32
    %22 = arith.select %21, %cst_20, %cst_21 : f32
    %23 = vector.extract_strided_slice %18 {offsets = [0, 0, 0], sizes = [1, 16, 32], strides = [1, 1, 1]} : vector<10x16x32xf32> to vector<1x16x32xf32>
    %24 = vector.broadcast %20 : f32 to vector<1x16x32xf32>
    %25 = arith.mulf %23, %24 : vector<1x16x32xf32>
    %26 = vector.extract_strided_slice %18 {offsets = [1, 0, 0], sizes = [8, 16, 32], strides = [1, 1, 1]} : vector<10x16x32xf32> to vector<8x16x32xf32>
    %27 = vector.extract_strided_slice %18 {offsets = [9, 0, 0], sizes = [1, 16, 32], strides = [1, 1, 1]} : vector<10x16x32xf32> to vector<1x16x32xf32>
    %28 = vector.broadcast %22 : f32 to vector<1x16x32xf32>
    %29 = arith.mulf %27, %28 : vector<1x16x32xf32>
    %30 = tpu.concatenate %25, %26, %29 in 0 : vector<1x16x32xf32>, vector<8x16x32xf32>, vector<1x16x32xf32> -> vector<10x16x32xf32>
    %cst_22 = arith.constant 0.000000e+00 : f32
    %31 = vector.broadcast %cst_22 : f32 to vector<10x1x32xf32>
    %32 = vector.extract_strided_slice %30 {offsets = [0, 0, 0], sizes = [10, 15, 32], strides = [1, 1, 1]} : vector<10x16x32xf32> to vector<10x15x32xf32>
    %33 = tpu.concatenate %31, %32 in 1 : vector<10x1x32xf32>, vector<10x15x32xf32> -> vector<10x16x32xf32>
    %34 = vector.extract_strided_slice %30 {offsets = [0, 1, 0], sizes = [10, 15, 32], strides = [1, 1, 1]} : vector<10x16x32xf32> to vector<10x15x32xf32>
    %35 = tpu.concatenate %34, %31 in 1 : vector<10x15x32xf32>, vector<10x1x32xf32> -> vector<10x16x32xf32>
    %36 = tpu.concatenate %33, %30, %35 in 2 : vector<10x16x32xf32>, vector<10x16x32xf32>, vector<10x16x32xf32> -> vector<10x16x96xf32>
    %37 = vector.extract_strided_slice %36 {offsets = [0, 0, 0], sizes = [8, 16, 96], strides = [1, 1, 1]} : vector<10x16x96xf32> to vector<8x16x96xf32>
    %38 = vector.extract_strided_slice %36 {offsets = [1, 0, 0], sizes = [8, 16, 96], strides = [1, 1, 1]} : vector<10x16x96xf32> to vector<8x16x96xf32>
    %39 = vector.extract_strided_slice %36 {offsets = [2, 0, 0], sizes = [8, 16, 96], strides = [1, 1, 1]} : vector<10x16x96xf32> to vector<8x16x96xf32>
    %40 = tpu.concatenate %37, %38, %39 in 2 : vector<8x16x96xf32>, vector<8x16x96xf32>, vector<8x16x96xf32> -> vector<8x16x288xf32>
    %41 = vector.shape_cast %40 : vector<8x16x288xf32> to vector<128x288xf32>
    %42 = arith.truncf %41 : vector<128x288xf32> to vector<128x288xbf16>
    %c0_23 = arith.constant 0 : index
    %c0_24 = arith.constant 0 : index
    %43 = vector.load %arg8[%c0_23, %c0_24] : memref<288x32xbf16, #tpu.memory_space<vmem>>, vector<288x32xbf16>
    %cst_25 = arith.constant dense<0.000000e+00> : vector<128x32xf32>
    %44 = tpu.matmul %42, %43, %cst_25 {dimension_numbers = #tpu.dot_dimension_numbers<[1], [0], [0], [1], [0, 0, 1, 1], [], []>} : vector<128x288xbf16>, vector<288x32xbf16>, vector<128x32xf32> -> vector<128x32xf32>
    %c0_26 = arith.constant 0 : index
    %c0_27 = arith.constant 0 : index
    %45 = vector.load %arg9[%c0_26, %c0_27] : memref<1x32xf32, #tpu.memory_space<vmem>>, vector<1x32xf32>
    %46 = vector.broadcast %45 : vector<1x32xf32> to vector<128x32xf32>
    %47 = arith.mulf %44, %46 : vector<128x32xf32>
    %c0_28 = arith.constant 0 : index
    %c0_29 = arith.constant 0 : index
    %48 = vector.load %arg10[%c0_28, %c0_29] : memref<1x32xf32, #tpu.memory_space<vmem>>, vector<1x32xf32>
    %49 = vector.broadcast %48 : vector<1x32xf32> to vector<128x32xf32>
    %50 = arith.addf %47, %49 : vector<128x32xf32>
    %cst_30 = arith.constant 0.000000e+00 : f32
    %51 = vector.broadcast %cst_30 : f32 to vector<128x32xf32>
    %52 = arith.maximumf %50, %51 : vector<128x32xf32>
    %53 = arith.truncf %52 : vector<128x32xf32> to vector<128x32xbf16>
    %c0_31 = arith.constant 0 : index
    %c0_32 = arith.constant 0 : index
    %54 = vector.load %arg11[%c0_31, %c0_32] : memref<32x128xbf16, #tpu.memory_space<vmem>>, vector<32x128xbf16>
    %cst_33 = arith.constant dense<0.000000e+00> : vector<128x128xf32>
    %55 = tpu.matmul %53, %54, %cst_33 {dimension_numbers = #tpu.dot_dimension_numbers<[1], [0], [0], [1], [0, 0, 1, 1], [], []>} : vector<128x32xbf16>, vector<32x128xbf16>, vector<128x128xf32> -> vector<128x128xf32>
    %c0_34 = arith.constant 0 : index
    %c0_35 = arith.constant 0 : index
    %56 = vector.load %arg12[%c0_34, %c0_35] : memref<1x128xf32, #tpu.memory_space<vmem>>, vector<1x128xf32>
    %57 = vector.broadcast %56 : vector<1x128xf32> to vector<128x128xf32>
    %58 = arith.mulf %55, %57 : vector<128x128xf32>
    %c0_36 = arith.constant 0 : index
    %c0_37 = arith.constant 0 : index
    %59 = vector.load %arg13[%c0_36, %c0_37] : memref<1x128xf32, #tpu.memory_space<vmem>>, vector<1x128xf32>
    %60 = vector.broadcast %59 : vector<1x128xf32> to vector<128x128xf32>
    %61 = arith.addf %58, %60 : vector<128x128xf32>
    %62 = vector.shape_cast %1 : vector<8x16x128xbf16> to vector<128x128xbf16>
    %63 = arith.extf %62 : vector<128x128xbf16> to vector<128x128xf32>
    %64 = arith.addf %61, %63 : vector<128x128xf32>
    %cst_38 = arith.constant 0.000000e+00 : f32
    %65 = vector.broadcast %cst_38 : f32 to vector<128x128xf32>
    %66 = arith.maximumf %64, %65 : vector<128x128xf32>
    %67 = vector.shape_cast %66 : vector<128x128xf32> to vector<8x16x128xf32>
    %c0_39 = arith.constant 0 : index
    %c0_40 = arith.constant 0 : index
    %c0_41 = arith.constant 0 : index
    %c0_42 = arith.constant 0 : index
    %68 = vector.load %arg14[%c0_39, %c0_40, %c0_41, %c0_42] : memref<1x8x16x128xf32, #tpu.memory_space<vmem>>, vector<1x8x16x128xf32>
    %69 = vector.shape_cast %68 : vector<1x8x16x128xf32> to vector<8x16x128xf32>
    %70 = vector.shape_cast %67 : vector<8x16x128xf32> to vector<1x8x16x128xf32>
    tpu.vector_store %arg14[%c0_39, %c0_40, %c0_41, %c0_42], %70 {strides = array<i32>} : memref<1x8x16x128xf32, #tpu.memory_space<vmem>>, vector<1x8x16x128xf32>,
    return
  }
  func.func @transform_0(%arg0: i32, %arg1: i32) -> (i32, i32, i32, i32) {
    %c0_i32 = arith.constant 0 : i32
    %c0_i32_0 = arith.constant 0 : i32
    %c0_i32_1 = arith.constant 0 : i32
    return %arg0, %arg1, %c0_i32, %c0_i32_0 : i32, i32, i32, i32
  }
  func.func @transform_1(%arg0: i32, %arg1: i32) -> (i32, i32, i32, i32) {
    %c8_i32 = arith.constant 8 : i32
    %0 = arith.muli %arg1, %c8_i32 : i32
    %c1_i32 = arith.constant 1 : i32
    %1 = arith.subi %0, %c1_i32 : i32
    %c0_i32 = arith.constant 0 : i32
    %2 = arith.maxsi %1, %c0_i32 : i32
    %c0_i32_0 = arith.constant 0 : i32
    %c0_i32_1 = arith.constant 0 : i32
    %c0_i32_2 = arith.constant 0 : i32
    return %arg0, %2, %c0_i32_0, %c0_i32_1 : i32, i32, i32, i32
  }
  func.func @transform_2(%arg0: i32, %arg1: i32) -> (i32, i32, i32, i32) {
    %c8_i32 = arith.constant 8 : i32
    %0 = arith.muli %arg1, %c8_i32 : i32
    %c8_i32_0 = arith.constant 8 : i32
    %1 = arith.addi %0, %c8_i32_0 : i32
    %c15_i32 = arith.constant 15 : i32
    %2 = arith.minsi %1, %c15_i32 : i32
    %c0_i32 = arith.constant 0 : i32
    %c0_i32_1 = arith.constant 0 : i32
    %c0_i32_2 = arith.constant 0 : i32
    return %arg0, %2, %c0_i32, %c0_i32_1 : i32, i32, i32, i32
  }
  func.func @transform_3(%arg0: i32, %arg1: i32) -> (i32, i32) {
    %c0_i32 = arith.constant 0 : i32
    %c0_i32_0 = arith.constant 0 : i32
    %c0_i32_1 = arith.constant 0 : i32
    return %c0_i32, %c0_i32_0 : i32, i32
  }
  func.func @transform_4(%arg0: i32, %arg1: i32) -> (i32, i32) {
    %c0_i32 = arith.constant 0 : i32
    %c0_i32_0 = arith.constant 0 : i32
    %c0_i32_1 = arith.constant 0 : i32
    return %c0_i32, %c0_i32_0 : i32, i32
  }
  func.func @transform_5(%arg0: i32, %arg1: i32) -> (i32, i32) {
    %c0_i32 = arith.constant 0 : i32
    %c0_i32_0 = arith.constant 0 : i32
    %c0_i32_1 = arith.constant 0 : i32
    return %c0_i32, %c0_i32_0 : i32, i32
  }
  func.func @transform_6(%arg0: i32, %arg1: i32) -> (i32, i32) {
    %c0_i32 = arith.constant 0 : i32
    %c0_i32_0 = arith.constant 0 : i32
    %c0_i32_1 = arith.constant 0 : i32
    return %c0_i32, %c0_i32_0 : i32, i32
  }
  func.func @transform_7(%arg0: i32, %arg1: i32) -> (i32, i32) {
    %c0_i32 = arith.constant 0 : i32
    %c0_i32_0 = arith.constant 0 : i32
    %c0_i32_1 = arith.constant 0 : i32
    return %c0_i32, %c0_i32_0 : i32, i32
  }
  func.func @transform_8(%arg0: i32, %arg1: i32) -> (i32, i32) {
    %c0_i32 = arith.constant 0 : i32
    %c0_i32_0 = arith.constant 0 : i32
    %c0_i32_1 = arith.constant 0 : i32
    return %c0_i32, %c0_i32_0 : i32, i32
  }
  func.func @transform_9(%arg0: i32, %arg1: i32) -> (i32, i32) {
    %c0_i32 = arith.constant 0 : i32
    %c0_i32_0 = arith.constant 0 : i32
    %c0_i32_1 = arith.constant 0 : i32
    return %c0_i32, %c0_i32_0 : i32, i32
  }
  func.func @transform_10(%arg0: i32, %arg1: i32) -> (i32, i32) {
    %c0_i32 = arith.constant 0 : i32
    %c0_i32_0 = arith.constant 0 : i32
    %c0_i32_1 = arith.constant 0 : i32
    return %c0_i32, %c0_i32_0 : i32, i32
  }
  func.func @transform_11(%arg0: i32, %arg1: i32) -> (i32, i32) {
    %c0_i32 = arith.constant 0 : i32
    %c0_i32_0 = arith.constant 0 : i32
    %c0_i32_1 = arith.constant 0 : i32
    return %c0_i32, %c0_i32_0 : i32, i32
  }
  func.func @transform_12(%arg0: i32, %arg1: i32) -> (i32, i32, i32, i32) {
    %c0_i32 = arith.constant 0 : i32
    %c0_i32_0 = arith.constant 0 : i32
    %c0_i32_1 = arith.constant 0 : i32
    return %arg0, %arg1, %c0_i32, %c0_i32_0 : i32, i32, i32, i32
  }
}

</mosaic_0001>

<llo_original>
// kernel: tpu_custom_call.1
$region0: #{tpu_custom_call.1}
  #allocation0 [shape = 'u32[]', space=smem, size = 0x4, offset = 0x4, fixed_abs, tag = 'smem constant byte address 0x4 - core index']
  #allocation1 [shape = 'u32[144,128]{1,0:T(1,128)}', space=vmem, size = 0x12000, scoped, tag = 'internal scratch']
  %s0 = inlined_call_operand.vmem [shape: bf16[2,16,16,128], index: 0, kind: input, shape index: {}]
  %s1 = inlined_call_operand.hbm [shape: bf16[2,16,16,128], index: 1, kind: input, shape index: {}]
  %s2 = inlined_call_operand.hbm [shape: bf16[2,16,16,128], index: 2, kind: input, shape index: {}]
  %s3 = inlined_call_operand.vmem [shape: bf16[128,32], index: 3, kind: input, shape index: {}]
  %s4 = inlined_call_operand.vmem [shape: f32[1,32], index: 4, kind: input, shape index: {}]
  %s5 = inlined_call_operand.vmem [shape: f32[1,32], index: 5, kind: input, shape index: {}]
  %s6 = inlined_call_operand.vmem [shape: bf16[288,32], index: 6, kind: input, shape index: {}]
  %s7 = inlined_call_operand.vmem [shape: f32[1,32], index: 7, kind: input, shape index: {}]
  %s8 = inlined_call_operand.vmem [shape: f32[1,32], index: 8, kind: input, shape index: {}]
  %s9 = inlined_call_operand.vmem [shape: bf16[32,128], index: 9, kind: input, shape index: {}]
  %s10 = inlined_call_operand.vmem [shape: f32[1,128], index: 10, kind: input, shape index: {}]
  %s11 = inlined_call_operand.vmem [shape: f32[1,128], index: 11, kind: input, shape index: {}]
  %s12 = inlined_call_operand.hbm [shape: f32[2,16,16,128], index: 12, kind: output, shape index: {}]
  %s13 = sld [smem:[#allocation0]]
  $region89: #{tpu_custom_call.1} parent=0
    _
  %s15 = ssub.s32 1, %s13
  %s16 = scalar_select 0, %s15, %s13
  $region1: #{tpu_custom_call.1} parent=0
    #allocation2 [shape = 'u8[8192]{0}', space=vmem, size = 0x2000, scoped, tag = 'input window, operand 1']
    #allocation3 [shape = 's32[2]{0}', space=sflag, size = 0x8, scoped, tag = 'scoped memory for tpu_custom_call.1']
    #allocation4 [shape = 's32[2]{0}', space=sflag, size = 0x8, scoped, tag = 'scoped memory for tpu_custom_call.1']
    #allocation5 [shape = 'u8[8192]{0}', space=vmem, size = 0x2000, scoped, tag = 'input window, operand 2']
    #allocation6 [shape = 's32[2]{0}', space=sflag, size = 0x8, scoped, tag = 'scoped memory for tpu_custom_call.1']
    #allocation7 [shape = 'u8[131072]{0}', space=vmem, size = 0x20000, scoped, tag = 'output window, operand 0']
    %17 = vsyncpa [#allocation3], 0
    %s18 = scalar_lea.sflag [#allocation3], 1
    %19 = vsyncpa %s18, 0
    %20 = vsyncpa [#allocation6], 0
    %s21 = scalar_lea.sflag [#allocation6], 1
    %22 = vsyncpa %s21, 0
    %23 = vsyncpa [#allocation4], 0
    %s24 = scalar_lea.sflag [#allocation4], 1
    %25 = vsyncpa %s24, 0
    loop: start=0, step=1, limit=6
    $region2: #{tpu_custom_call.1} parent=1 // loop_pre_header
      _
    $region3: #{tpu_custom_call.1} parent=1 // loop_header
      %s27 = sphi 0, %s31
      %p28 = scmp.ge.s32.totalorder %s27, 6
      %s34 = sphi 0, %s46
      %s35 = sphi 0, %s42
      %s36 = sphi 0, %s34
      %s37 = sphi 0, %s35
      %s38 = sphi 0, %s36
      %s39 = sphi 0, %s37
      %s51 = sphi 0, %s53
      %s54 = sphi 0, %s51
      %s55 = sphi 0, %s54
      %s71 = sphi 0, %s55
      %s87 = sphi 0, %s89
      %s90 = sphi 0, %s87
      %s91 = sphi 0, %s90
      %s107 = sphi 0, %s91
      %s123 = sphi 0, %s125
      %s126 = sphi 0, %s123
      %s127 = sphi 0, %s126
      %s143 = sphi 0, %s127
      %s147 = sphi 0, %s147
      %s149 = sphi 0, %s147
      %s150 = sphi 0, %s149
      %s164 = sphi 0, %s150
      %s168 = sphi 0, %s168
      %s170 = sphi 0, %s168
      %s171 = sphi 0, %s170
      %s185 = sphi 0, %s171
      %s189 = sphi 0, %s189
      %s191 = sphi 0, %s189
      %s192 = sphi 0, %s191
      %s206 = sphi 0, %s192
      %s210 = sphi 0, %s210
      %s212 = sphi 0, %s210
      %s213 = sphi 0, %s212
      %s227 = sphi 0, %s213
      %s231 = sphi 0, %s231
      %s233 = sphi 0, %s231
      %s234 = sphi 0, %s233
      %s248 = sphi 0, %s234
      %s252 = sphi 0, %s252
      %s254 = sphi 0, %s252
      %s255 = sphi 0, %s254
      %s269 = sphi 0, %s255
      %s273 = sphi 0, %s273
      %s275 = sphi 0, %s273
      %s276 = sphi 0, %s275
      %s290 = sphi 0, %s276
      %s294 = sphi 0, %s294
      %s296 = sphi 0, %s294
      %s297 = sphi 0, %s296
      %s311 = sphi 0, %s297
      %s315 = sphi 0, %s315
      %s317 = sphi 0, %s315
      %s318 = sphi 0, %s317
      %s332 = sphi 0, %s318
      %s340 = sphi 0, %s342
      %s343 = sphi 0, %s340
      %s344 = sphi 0, %s343
      %s360 = sphi 0, %s344
    $region4: #{tpu_custom_call.1} parent=1 // loop_header_branch
      %30 = sbr.rel (%p28) target = $region8
    $region5: #{tpu_custom_call.1} parent=1 // loop_body
      %s32 = ssub.s32 %s27, 1
      %s33 = ssub.s32 %s27, 2
      %s40 = sadd.s32 1, %s35
      %p41 = scmp.ge.s32.totalorder %s40, 2
      %s42 = scalar_select %p41, 0, %s40
      %s43 = sadd.s32 1, %s34
      %s44 = scalar_select %p41, %s43, %s34
      %p45 = scmp.ge.s32.totalorder %s44, 2
      %s46 = scalar_select %p45, 0, %s44
      %s47 = ssub.s32 %s34, %s46
      %s48 = ssub.s32 %s35, %s42
      %s49 = sor.u32 %s47, %s48
      %p50 = scmp.eq.s32.totalorder %s49, 0
      %s52 = sadd.s32 %s51, 1
      %s53 = scalar_select %p50, %s51, %s52
      %p56 = pneg %p50
      %p57 = scmp.eq.s32.totalorder %s27, 3
      %p58 = por %p56, %p57
      %p59 = scmp.ne.s32.totalorder %s51, %s54
      %p60 = scmp.eq.s32.totalorder %s27, 0
      %p61 = por %p59, %p60
      %p62 = scmp.ne.s32.totalorder %s51, %s54
      %p63 = scmp.eq.s32.totalorder %s32, 3
      %p64 = por %p62, %p63
      %p65 = scmp.ne.s32.totalorder %s54, %s55
      %p66 = scmp.eq.s32.totalorder %s32, 0
      %p67 = por %p65, %p66
      %p68 = scmp.ne.s32.totalorder %s54, %s55
      %p69 = scmp.eq.s32.totalorder %s33, 3
      %p70 = por %p68, %p69
      %p72 = scmp.ne.s32.totalorder %s55, %s71
      %p73 = scmp.eq.s32.totalorder %s33, 0
      %p74 = por %p72, %p73
      %s75 = smul.u32 %s35, 8
      %s76 = ssub.s32 %s75, 1
      %p77 = scmp.gt.s32.totalorder %s76, 0
      %s78 = scalar_select %p77, %s76, 0
      %s79 = smul.u32 %s42, 8
      %s80 = ssub.s32 %s79, 1
      %p81 = scmp.gt.s32.totalorder %s80, 0
      %s82 = scalar_select %p81, %s80, 0
      %s83 = ssub.s32 %s34, %s46
      %s84 = ssub.s32 %s78, %s82
      %s85 = sor.u32 %s83, %s84
      %p86 = scmp.eq.s32.totalorder %s85, 0
      %s88 = sadd.s32 %s87, 1
      %s89 = scalar_select %p86, %s87, %s88
      %p92 = pneg %p86
      %p93 = scmp.eq.s32.totalorder %s27, 3
      %p94 = por %p92, %p93
      %p95 = scmp.ne.s32.totalorder %s87, %s90
      %p96 = scmp.eq.s32.totalorder %s27, 0
      %p97 = por %p95, %p96
      %p98 = scmp.ne.s32.totalorder %s87, %s90
      %p99 = scmp.eq.s32.totalorder %s32, 3
      %p100 = por %p98, %p99
      %p101 = scmp.ne.s32.totalorder %s90, %s91
      %p102 = scmp.eq.s32.totalorder %s32, 0
      %p103 = por %p101, %p102
      %p104 = scmp.ne.s32.totalorder %s90, %s91
      %p105 = scmp.eq.s32.totalorder %s33, 3
      %p106 = por %p104, %p105
      %p108 = scmp.ne.s32.totalorder %s91, %s107
      %p109 = scmp.eq.s32.totalorder %s33, 0
      %p110 = por %p108, %p109
      %s111 = smul.u32 %s35, 8
      %s112 = sadd.s32 %s111, 8
      %p113 = scmp.lt.s32.totalorder %s112, 15
      %s114 = scalar_select %p113, %s112, 15
      %s115 = smul.u32 %s42, 8
      %s116 = sadd.s32 %s115, 8
      %p117 = scmp.lt.s32.totalorder %s116, 15
      %s118 = scalar_select %p117, %s116, 15
      %s119 = ssub.s32 %s34, %s46
      %s120 = ssub.s32 %s114, %s118
      %s121 = sor.u32 %s119, %s120
      %p122 = scmp.eq.s32.totalorder %s121, 0
      %s124 = sadd.s32 %s123, 1
      %s125 = scalar_select %p122, %s123, %s124
      %p128 = pneg %p122
      %p129 = scmp.eq.s32.totalorder %s27, 3
      %p130 = por %p128, %p129
      %p131 = scmp.ne.s32.totalorder %s123, %s126
      %p132 = scmp.eq.s32.totalorder %s27, 0
      %p133 = por %p131, %p132
      %p134 = scmp.ne.s32.totalorder %s123, %s126
      %p135 = scmp.eq.s32.totalorder %s32, 3
      %p136 = por %p134, %p135
      %p137 = scmp.ne.s32.totalorder %s126, %s127
      %p138 = scmp.eq.s32.totalorder %s32, 0
      %p139 = por %p137, %p138
      %p140 = scmp.ne.s32.totalorder %s126, %s127
      %p141 = scmp.eq.s32.totalorder %s33, 3
      %p142 = por %p140, %p141
      %p144 = scmp.ne.s32.totalorder %s127, %s143
      %p145 = scmp.eq.s32.totalorder %s33, 0
      %p146 = por %p144, %p145
      %s148 = sadd.s32 %s147, 1
      %p151 = scmp.eq.s32.totalorder %s27, 3
      %p152 = scmp.ne.s32.totalorder %s147, %s149
      %p153 = scmp.eq.s32.totalorder %s27, 0
      %p154 = por %p152, %p153
      %p155 = scmp.ne.s32.totalorder %s147, %s149
      %p156 = scmp.eq.s32.totalorder %s32, 3
      %p157 = por %p155, %p156
      %p158 = scmp.ne.s32.totalorder %s149, %s150
      %p159 = scmp.eq.s32.totalorder %s32, 0
      %p160 = por %p158, %p159
      %p161 = scmp.ne.s32.totalorder %s149, %s150
      %p162 = scmp.eq.s32.totalorder %s33, 3
      %p163 = por %p161, %p162
      %p165 = scmp.ne.s32.totalorder %s150, %s164
      %p166 = scmp.eq.s32.totalorder %s33, 0
      %p167 = por %p165, %p166
      %s169 = sadd.s32 %s168, 1
      %p172 = scmp.eq.s32.totalorder %s27, 3
      %p173 = scmp.ne.s32.totalorder %s168, %s170
      %p174 = scmp.eq.s32.totalorder %s27, 0
      %p175 = por %p173, %p174
      %p176 = scmp.ne.s32.totalorder %s168, %s170
      %p177 = scmp.eq.s32.totalorder %s32, 3
      %p178 = por %p176, %p177
      %p179 = scmp.ne.s32.totalorder %s170, %s171
      %p180 = scmp.eq.s32.totalorder %s32, 0
      %p181 = por %p179, %p180
      %p182 = scmp.ne.s32.totalorder %s170, %s171
      %p183 = scmp.eq.s32.totalorder %s33, 3
      %p184 = por %p182, %p183
      %p186 = scmp.ne.s32.totalorder %s171, %s185
      %p187 = scmp.eq.s32.totalorder %s33, 0
      %p188 = por %p186, %p187
      %s190 = sadd.s32 %s189, 1
      %p193 = scmp.eq.s32.totalorder %s27, 3
      %p194 = scmp.ne.s32.totalorder %s189, %s191
      %p195 = scmp.eq.s32.totalorder %s27, 0
      %p196 = por %p194, %p195
      %p197 = scmp.ne.s32.totalorder %s189, %s191
      %p198 = scmp.eq.s32.totalorder %s32, 3
      %p199 = por %p197, %p198
      %p200 = scmp.ne.s32.totalorder %s191, %s192
      %p201 = scmp.eq.s32.totalorder %s32, 0
      %p202 = por %p200, %p201
      %p203 = scmp.ne.s32.totalorder %s191, %s192
      %p204 = scmp.eq.s32.totalorder %s33, 3
      %p205 = por %p203, %p204
      %p207 = scmp.ne.s32.totalorder %s192, %s206
      %p208 = scmp.eq.s32.totalorder %s33, 0
      %p209 = por %p207, %p208
      %s211 = sadd.s32 %s210, 1
      %p214 = scmp.eq.s32.totalorder %s27, 3
      %p215 = scmp.ne.s32.totalorder %s210, %s212
      %p216 = scmp.eq.s32.totalorder %s27, 0
      %p217 = por %p215, %p216
      %p218 = scmp.ne.s32.totalorder %s210, %s212
      %p219 = scmp.eq.s32.totalorder %s32, 3
      %p220 = por %p218, %p219
      %p221 = scmp.ne.s32.totalorder %s212, %s213
      %p222 = scmp.eq.s32.totalorder %s32, 0
      %p223 = por %p221, %p222
      %p224 = scmp.ne.s32.totalorder %s212, %s213
      %p225 = scmp.eq.s32.totalorder %s33, 3
      %p226 = por %p224, %p225
      %p228 = scmp.ne.s32.totalorder %s213, %s227
      %p229 = scmp.eq.s32.totalorder %s33, 0
      %p230 = por %p228, %p229
      %s232 = sadd.s32 %s231, 1
      %p235 = scmp.eq.s32.totalorder %s27, 3
      %p236 = scmp.ne.s32.totalorder %s231, %s233
      %p237 = scmp.eq.s32.totalorder %s27, 0
      %p238 = por %p236, %p237
      %p239 = scmp.ne.s32.totalorder %s231, %s233
      %p240 = scmp.eq.s32.totalorder %s32, 3
      %p241 = por %p239, %p240
      %p242 = scmp.ne.s32.totalorder %s233, %s234
      %p243 = scmp.eq.s32.totalorder %s32, 0
      %p244 = por %p242, %p243
      %p245 = scmp.ne.s32.totalorder %s233, %s234
      %p246 = scmp.eq.s32.totalorder %s33, 3
      %p247 = por %p245, %p246
      %p249 = scmp.ne.s32.totalorder %s234, %s248
      %p250 = scmp.eq.s32.totalorder %s33, 0
      %p251 = por %p249, %p250
      %s253 = sadd.s32 %s252, 1
      %p256 = scmp.eq.s32.totalorder %s27, 3
      %p257 = scmp.ne.s32.totalorder %s252, %s254
      %p258 = scmp.eq.s32.totalorder %s27, 0
      %p259 = por %p257, %p258
      %p260 = scmp.ne.s32.totalorder %s252, %s254
      %p261 = scmp.eq.s32.totalorder %s32, 3
      %p262 = por %p260, %p261
      %p263 = scmp.ne.s32.totalorder %s254, %s255
      %p264 = scmp.eq.s32.totalorder %s32, 0
      %p265 = por %p263, %p264
      %p266 = scmp.ne.s32.totalorder %s254, %s255
      %p267 = scmp.eq.s32.totalorder %s33, 3
      %p268 = por %p266, %p267
      %p270 = scmp.ne.s32.totalorder %s255, %s269
      %p271 = scmp.eq.s32.totalorder %s33, 0
      %p272 = por %p270, %p271
      %s274 = sadd.s32 %s273, 1
      %p277 = scmp.eq.s32.totalorder %s27, 3
      %p278 = scmp.ne.s32.totalorder %s273, %s275
      %p279 = scmp.eq.s32.totalorder %s27, 0
      %p280 = por %p278, %p279
      %p281 = scmp.ne.s32.totalorder %s273, %s275
      %p282 = scmp.eq.s32.totalorder %s32, 3
      %p283 = por %p281, %p282
      %p284 = scmp.ne.s32.totalorder %s275, %s276
      %p285 = scmp.eq.s32.totalorder %s32, 0
      %p286 = por %p284, %p285
      %p287 = scmp.ne.s32.totalorder %s275, %s276
      %p288 = scmp.eq.s32.totalorder %s33, 3
      %p289 = por %p287, %p288
      %p291 = scmp.ne.s32.totalorder %s276, %s290
      %p292 = scmp.eq.s32.totalorder %s33, 0
      %p293 = por %p291, %p292
      %s295 = sadd.s32 %s294, 1
      %p298 = scmp.eq.s32.totalorder %s27, 3
      %p299 = scmp.ne.s32.totalorder %s294, %s296
      %p300 = scmp.eq.s32.totalorder %s27, 0
      %p301 = por %p299, %p300
      %p302 = scmp.ne.s32.totalorder %s294, %s296
      %p303 = scmp.eq.s32.totalorder %s32, 3
      %p304 = por %p302, %p303
      %p305 = scmp.ne.s32.totalorder %s296, %s297
      %p306 = scmp.eq.s32.totalorder %s32, 0
      %p307 = por %p305, %p306
      %p308 = scmp.ne.s32.totalorder %s296, %s297
      %p309 = scmp.eq.s32.totalorder %s33, 3
      %p310 = por %p308, %p309
      %p312 = scmp.ne.s32.totalorder %s297, %s311
      %p313 = scmp.eq.s32.totalorder %s33, 0
      %p314 = por %p312, %p313
      %s316 = sadd.s32 %s315, 1
      %p319 = scmp.eq.s32.totalorder %s27, 3
      %p320 = scmp.ne.s32.totalorder %s315, %s317
      %p321 = scmp.eq.s32.totalorder %s27, 0
      %p322 = por %p320, %p321
      %p323 = scmp.ne.s32.totalorder %s315, %s317
      %p324 = scmp.eq.s32.totalorder %s32, 3
      %p325 = por %p323, %p324
      %p326 = scmp.ne.s32.totalorder %s317, %s318
      %p327 = scmp.eq.s32.totalorder %s32, 0
      %p328 = por %p326, %p327
      %p329 = scmp.ne.s32.totalorder %s317, %s318
      %p330 = scmp.eq.s32.totalorder %s33, 3
      %p331 = por %p329, %p330
      %p333 = scmp.ne.s32.totalorder %s318, %s332
      %p334 = scmp.eq.s32.totalorder %s33, 0
      %p335 = por %p333, %p334
      %s336 = ssub.s32 %s34, %s46
      %s337 = ssub.s32 %s35, %s42
      %s338 = sor.u32 %s336, %s337
      %p339 = scmp.eq.s32.totalorder %s338, 0
      %s341 = sadd.s32 %s340, 1
      %s342 = scalar_select %p339, %s340, %s341
      %p345 = pneg %p339
      %p346 = scmp.eq.s32.totalorder %s27, 3
      %p347 = por %p345, %p346
      %p348 = scmp.ne.s32.totalorder %s340, %s343
      %p349 = scmp.eq.s32.totalorder %s27, 0
      %p350 = por %p348, %p349
      %p351 = scmp.ne.s32.totalorder %s340, %s343
      %p352 = scmp.eq.s32.totalorder %s32, 3
      %p353 = por %p351, %p352
      %p354 = scmp.ne.s32.totalorder %s343, %s344
      %p355 = scmp.eq.s32.totalorder %s32, 0
      %p356 = por %p354, %p355
      %p357 = scmp.ne.s32.totalorder %s343, %s344
      %p358 = scmp.eq.s32.totalorder %s33, 3
      %p359 = por %p357, %p358
      %p361 = scmp.ne.s32.totalorder %s344, %s360
      %p362 = scmp.eq.s32.totalorder %s33, 0
      %p363 = por %p361, %p362
      %p364 = scmp.le.s32.totalorder 1, %s27
      %p365 = scmp.lt.s32.totalorder %s27, 5
      %p366 = pnand %p364, %p365
      %p367 = pneg %p366
      // Predicated region
      $region9: #{tpu_custom_call.1} parent=5 // pred_check
        _
      $region10: #{tpu_custom_call.1} parent=5 // pred_check_branch
        %369 = sbr.rel (%p366) target = $region12
      $region11: #{tpu_custom_call.1} parent=5 // pred_region
        %s370 = ssub.s32 %s27, 1
        // Predicated region
        $region13: #{tpu_custom_call.1} parent=11 // pred_check
          %p371 = pneg %p160
        $region14: #{tpu_custom_call.1} parent=11 // pred_check_branch
          %373 = sbr.rel (%p371) target = $region16
        $region15: #{tpu_custom_call.1} parent=11 // pred_region
          _
        $region16: #{tpu_custom_call.1} parent=11 // pred_fallthru
          _
        // Predicated region
        $region17: #{tpu_custom_call.1} parent=11 // pred_check
          %p374 = pneg %p181
        $region18: #{tpu_custom_call.1} parent=11 // pred_check_branch
          %376 = sbr.rel (%p374) target = $region20
        $region19: #{tpu_custom_call.1} parent=11 // pred_region
          _
        $region20: #{tpu_custom_call.1} parent=11 // pred_fallthru
          _
        // Predicated region
        $region21: #{tpu_custom_call.1} parent=11 // pred_check
          %p377 = pneg %p202
        $region22: #{tpu_custom_call.1} parent=11 // pred_check_branch
          %379 = sbr.rel (%p377) target = $region24
        $region23: #{tpu_custom_call.1} parent=11 // pred_region
          _
        $region24: #{tpu_custom_call.1} parent=11 // pred_fallthru
          _
        // Predicated region
        $region25: #{tpu_custom_call.1} parent=11 // pred_check
          %p380 = pneg %p223
        $region26: #{tpu_custom_call.1} parent=11 // pred_check_branch
          %382 = sbr.rel (%p380) target = $region28
        $region27: #{tpu_custom_call.1} parent=11 // pred_region
          _
        $region28: #{tpu_custom_call.1} parent=11 // pred_fallthru
          _
        // Predicated region
        $region29: #{tpu_custom_call.1} parent=11 // pred_check
          %p383 = pneg %p244
        $region30: #{tpu_custom_call.1} parent=11 // pred_check_branch
          %385 = sbr.rel (%p383) target = $region32
        $region31: #{tpu_custom_call.1} parent=11 // pred_region
          _
        $region32: #{tpu_custom_call.1} parent=11 // pred_fallthru
          _
        // Predicated region
        $region33: #{tpu_custom_call.1} parent=11 // pred_check
          %p386 = pneg %p265
        $region34: #{tpu_custom_call.1} parent=11 // pred_check_branch
          %388 = sbr.rel (%p386) target = $region36
        $region35: #{tpu_custom_call.1} parent=11 // pred_region
          _
        $region36: #{tpu_custom_call.1} parent=11 // pred_fallthru
          _
        // Predicated region
        $region37: #{tpu_custom_call.1} parent=11 // pred_check
          %p389 = pneg %p286
        $region38: #{tpu_custom_call.1} parent=11 // pred_check_branch
          %391 = sbr.rel (%p389) target = $region40
        $region39: #{tpu_custom_call.1} parent=11 // pred_region
          _
        $region40: #{tpu_custom_call.1} parent=11 // pred_fallthru
          _
        // Predicated region
        $region41: #{tpu_custom_call.1} parent=11 // pred_check
          %p392 = pneg %p307
        $region42: #{tpu_custom_call.1} parent=11 // pred_check_branch
          %394 = sbr.rel (%p392) target = $region44
        $region43: #{tpu_custom_call.1} parent=11 // pred_region
          _
        $region44: #{tpu_custom_call.1} parent=11 // pred_fallthru
          _
        // Predicated region
        $region45: #{tpu_custom_call.1} parent=11 // pred_check
          %p395 = pneg %p328
        $region46: #{tpu_custom_call.1} parent=11 // pred_check_branch
          %397 = sbr.rel (%p395) target = $region48
        $region47: #{tpu_custom_call.1} parent=11 // pred_region
          _
        $region48: #{tpu_custom_call.1} parent=11 // pred_fallthru
          _
      $region12: #{tpu_custom_call.1} parent=5 // pred_fallthru
        _
      %p398 = scmp.lt.s32.totalorder %s27, 4
      // Predicated region
      $region49: #{tpu_custom_call.1} parent=5 // pred_check
        %p399 = pneg %p398
      $region50: #{tpu_custom_call.1} parent=5 // pred_check_branch
        %401 = sbr.rel (%p399) target = $region52
      $region51: #{tpu_custom_call.1} parent=5 // pred_region
        // Predicated region
        $region53: #{tpu_custom_call.1} parent=51 // pred_check
          %p402 = pneg %p61
        $region54: #{tpu_custom_call.1} parent=51 // pred_check_branch
          %404 = sbr.rel (%p402) target = $region56
        $region55: #{tpu_custom_call.1} parent=51 // pred_region
          %s405 = smul.u32 8, %s35
          %p406 = scmp.lt.s32.totalorder %s34, 1
          %s407 = scalar_select %p406, %s34, 1
          %p408 = scmp.lt.s32.totalorder %s405, 15
          %s409 = scalar_select %p408, %s405, 15
          %s410 = smul.addr %s409, 2
          %s411 = smul.addr %s407, 32
          %s412 = sadd.s32 %s410, %s411
          %s413 = smul.addr %s412, 4
          %s414 = scalar_lea.vmem %s0, %s413
          %s415 = smul.u32 8, %s35
        $region56: #{tpu_custom_call.1} parent=51 // pred_fallthru
          _
        // Predicated region
        $region57: #{tpu_custom_call.1} parent=51 // pred_check
          %p416 = pneg %p97
        $region58: #{tpu_custom_call.1} parent=51 // pred_check_branch
          %418 = sbr.rel (%p416) target = $region60
        $region59: #{tpu_custom_call.1} parent=51 // pred_region
          %s419 = sand.u32 %s87, 1
          %s420 = scalar_lea.sflag [#allocation3], %s419
          %s421 = sand.u32 %s87, 1
          %s422 = smul.addr %s421, 8
          %s423 = scalar_lea.vmem [#allocation2], %s422
          %s424 = smul.u32 %s35, 8
          %s425 = ssub.s32 %s424, 1
          %p426 = scmp.gt.s32.totalorder %s425, 0
          %s427 = scalar_select %p426, %s425, 0
          %s429 = ssub.s32 128, 128
          %430 = vsyncadd %s420, %s429
          %s431 = smul.addr %s427, 2
          %s432 = smul.addr %s34, 32
          %s433 = sadd.s32 %s431, %s432
          %s434 = smul.addr %s433, 64
          %s435 = scalar_lea.hbm %s1, %s434
          %s436 = sshll.u32 %s423, 4
          %s437 = int_to_ptr.vmem [resolvable:$true] %s436
          %442 = dma.hbm_to_vmem [thread:$0]  %s435, 128, %s437, %s420, 64, 64, 4
        $region60: #{tpu_custom_call.1} parent=51 // pred_fallthru
          _
        // Predicated region
        $region61: #{tpu_custom_call.1} parent=51 // pred_check
          %p443 = pneg %p133
        $region62: #{tpu_custom_call.1} parent=51 // pred_check_branch
          %445 = sbr.rel (%p443) target = $region64
        $region63: #{tpu_custom_call.1} parent=51 // pred_region
          %s446 = sand.u32 %s123, 1
          %s447 = scalar_lea.sflag [#allocation6], %s446
          %s448 = sand.u32 %s123, 1
          %s449 = smul.addr %s448, 8
          %s450 = scalar_lea.vmem [#allocation5], %s449
          %s451 = smul.u32 %s35, 8
          %s452 = sadd.s32 %s451, 8
          %p453 = scmp.lt.s32.totalorder %s452, 15
          %s454 = scalar_select %p453, %s452, 15
          %s456 = ssub.s32 128, 128
          %457 = vsyncadd %s447, %s456
          %s458 = smul.addr %s454, 2
          %s459 = smul.addr %s34, 32
          %s460 = sadd.s32 %s458, %s459
          %s461 = smul.addr %s460, 64
          %s462 = scalar_lea.hbm %s2, %s461
          %s463 = sshll.u32 %s450, 4
          %s464 = int_to_ptr.vmem [resolvable:$true] %s463
          %469 = dma.hbm_to_vmem [thread:$0]  %s462, 128, %s464, %s447, 64, 64, 4
        $region64: #{tpu_custom_call.1} parent=51 // pred_fallthru
          _
      $region52: #{tpu_custom_call.1} parent=5 // pred_fallthru
        _
      %p470 = scmp.le.s32.totalorder 1, %s27
      %p471 = scmp.lt.s32.totalorder %s27, 5
      %p472 = pnand %p470, %p471
      %p473 = pneg %p472
      // Predicated region
      $region65: #{tpu_custom_call.1} parent=5 // pred_check
        _
      $region66: #{tpu_custom_call.1} parent=5 // pred_check_branch
        %475 = sbr.rel (%p472) target = $region68
      $region67: #{tpu_custom_call.1} parent=5 // pred_region
        %s476 = ssub.s32 %s27, 1
        %s477 = sand.u32 %s90, 1
        %s478 = scalar_lea.sflag [#allocation3], %s477
        %s479 = sand.u32 %s90, 1
        %s480 = smul.addr %s479, 8
        %s481 = scalar_lea.vmem [#allocation2], %s480
        // Predicated region
        $region69: #{tpu_custom_call.1} parent=67 // pred_check
          %p482 = pneg %p103
        $region70: #{tpu_custom_call.1} parent=67 // pred_check_branch
          %484 = sbr.rel (%p482) target = $region72
        $region71: #{tpu_custom_call.1} parent=67 // pred_region
          %485 = dma.done %s478, 128
        $region72: #{tpu_custom_call.1} parent=67 // pred_fallthru
          _
        %s486 = sand.u32 %s126, 1
        %s487 = scalar_lea.sflag [#allocation6], %s486
        %s488 = sand.u32 %s126, 1
        %s489 = smul.addr %s488, 8
        %s490 = scalar_lea.vmem [#allocation5], %s489
        // Predicated region
        $region73: #{tpu_custom_call.1} parent=67 // pred_check
          %p491 = pneg %p139
        $region74: #{tpu_custom_call.1} parent=67 // pred_check_branch
          %493 = sbr.rel (%p491) target = $region76
        $region75: #{tpu_custom_call.1} parent=67 // pred_region
          %494 = dma.done %s487, 128
        $region76: #{tpu_custom_call.1} parent=67 // pred_fallthru
          _
        %s495 = smul.u32 8, %s37
        %p496 = scmp.lt.s32.totalorder %s36, 1
        %s497 = scalar_select %p496, %s36, 1
        %p498 = scmp.lt.s32.totalorder %s495, 15
        %s499 = scalar_select %p498, %s495, 15
        %s500 = smul.addr %s499, 2
        %s501 = smul.addr %s497, 32
        %s502 = sadd.s32 %s500, %s501
        %s503 = smul.addr %s502, 4
        %s504 = scalar_lea.vmem %s0, %s503
        %p505 = pneg %p67
        %p506 = pneg %p64
        %s507 = sand.u32 %s90, 1
        %s508 = scalar_lea.sflag [#allocation3], %s507
        %s509 = sand.u32 %s90, 1
        %s510 = smul.addr %s509, 8
        %s511 = scalar_lea.vmem [#allocation2], %s510
        %p512 = pneg %p103
        %p513 = pneg %p100
        %s514 = sand.u32 %s126, 1
        %s515 = scalar_lea.sflag [#allocation6], %s514
        %s516 = sand.u32 %s126, 1
        %s517 = smul.addr %s516, 8
        %s518 = scalar_lea.vmem [#allocation5], %s517
        %p519 = pneg %p139
        %p520 = pneg %p136
        %p521 = pneg %p160
        %p522 = pneg %p157
        %p523 = pneg %p181
        %p524 = pneg %p178
        %p525 = pneg %p202
        %p526 = pneg %p199
        %p527 = pneg %p223
        %p528 = pneg %p220
        %p529 = pneg %p244
        %p530 = pneg %p241
        %p531 = pneg %p265
        %p532 = pneg %p262
        %p533 = pneg %p286
        %p534 = pneg %p283
        %p535 = pneg %p307
        %p536 = pneg %p304
        %p537 = pneg %p328
        %p538 = pneg %p325
        %p539 = pneg %p356
        %p540 = pneg %p353
        %s541 = sand.u32 %s343, 1
        %s542 = scalar_lea.sflag [#allocation4], %s541
        %s543 = sand.u32 %s343, 1
        %s544 = smul.addr %s543, 128
        %s545 = scalar_lea.vmem [#allocation7], %s544
        %s546 = smul.u32 8, %s37
        %p547 = scmp.lt.s32.totalorder %s36, 1
        %s548 = scalar_select %p547, %s36, 1
        %p549 = scmp.lt.s32.totalorder %s546, 15
        %s550 = scalar_select %p549, %s546, 15
        %s551 = smul.addr %s550, 2
        %s552 = smul.addr %s548, 32
        %s553 = sadd.s32 %s551, %s552
        %s554 = smul.addr %s553, 4
        %s555 = scalar_lea.vmem %s0, %s554
        %s556 = smul.u32 8, %s37
        %s557 = smul.u32 %s37, 8
        %s558 = ssub.s32 %s557, 1
        %p559 = scmp.gt.s32.totalorder %s558, 0
        %s560 = scalar_select %p559, %s558, 0
        %s561 = smul.u32 %s37, 8
        %s562 = sadd.s32 %s561, 8
        %p563 = scmp.lt.s32.totalorder %s562, 15
        %s564 = scalar_select %p563, %s562, 15
        %s565 = smul.u32 8, %s37
        %v567 = vld [vmem:[%s555] sm:$0xf]
        %v568 = vld [vmem:[%s555 + $0x4] sm:$0xf]
        %v569 = vld [vmem:[%s555 + $0x8] sm:$0xf]
        %v570 = vld [vmem:[%s555 + $0xc] sm:$0xf]
        %v571 = vld [vmem:[%s555 + $0x10] sm:$0xf]
        %v572 = vld [vmem:[%s555 + $0x14] sm:$0xf]
        %v573 = vld [vmem:[%s555 + $0x18] sm:$0xf]
        %v574 = vld [vmem:[%s555 + $0x1c] sm:$0xf]
        %v575 = vld [vmem:[%s555 + $0x20] sm:$0xf]
        %v576 = vld [vmem:[%s555 + $0x24] sm:$0xf]
        %v577 = vld [vmem:[%s555 + $0x28] sm:$0xf]
        %v578 = vld [vmem:[%s555 + $0x2c] sm:$0xf]
        %v579 = vld [vmem:[%s555 + $0x30] sm:$0xf]
        %v580 = vld [vmem:[%s555 + $0x34] sm:$0xf]
        %v581 = vld [vmem:[%s555 + $0x38] sm:$0xf]
        %v582 = vld [vmem:[%s555 + $0x3c] sm:$0xf]
        %v583 = vld [vmem:[%s481] sm:$0xf]
        %v584 = vld [vmem:[%s481 + $0x4] sm:$0xf]
        %v585 = vld [vmem:[%s490] sm:$0xf]
        %v586 = vld [vmem:[%s490 + $0x4] sm:$0xf]
        %v587 = vld [vmem:[%s3] sm:$0xf]
        %v588 = vld [vmem:[%s3 + $0x4] sm:$0xf]
        %v589 = vld [vmem:[%s3 + $0x8] sm:$0xf]
        %v590 = vld [vmem:[%s3 + $0xc] sm:$0xf]
        %v591 = vld [vmem:[%s3 + $0x10] sm:$0xf]
        %v592 = vld [vmem:[%s3 + $0x14] sm:$0xf]
        %v593 = vld [vmem:[%s3 + $0x18] sm:$0xf]
        %v594 = vld [vmem:[%s3 + $0x1c] sm:$0xf]
        %v595 = vld [vmem:[%s3 + $0x20] sm:$0xf]
        %v596 = vld [vmem:[%s3 + $0x24] sm:$0xf]
        %v597 = vld [vmem:[%s3 + $0x28] sm:$0xf]
        %v598 = vld [vmem:[%s3 + $0x2c] sm:$0xf]
        %v599 = vld [vmem:[%s3 + $0x30] sm:$0xf]
        %v600 = vld [vmem:[%s3 + $0x34] sm:$0xf]
        %v601 = vld [vmem:[%s3 + $0x38] sm:$0xf]
        %v602 = vld [vmem:[%s3 + $0x3c] sm:$0xf]
        %v623 = vunpack.c.l.b16 %v583
        %v624 = vunpack.c.l.b16 %v584
        %v625 = vunpack.c.l.b16 %v567
        %v626 = vunpack.c.l.b16 %v568
        %v627 = vunpack.c.l.b16 %v569
        %v628 = vunpack.c.l.b16 %v570
        %v629 = vunpack.c.l.b16 %v571
        %v630 = vunpack.c.l.b16 %v572
        %v631 = vunpack.c.l.b16 %v573
        %v632 = vunpack.c.l.b16 %v574
        %v633 = vunpack.c.l.b16 %v575
        %v634 = vunpack.c.l.b16 %v576
        %v635 = vunpack.c.l.b16 %v577
        %v636 = vunpack.c.l.b16 %v578
        %v637 = vunpack.c.l.b16 %v579
        %v638 = vunpack.c.l.b16 %v580
        %v639 = vunpack.c.l.b16 %v581
        %v640 = vunpack.c.l.b16 %v582
        %v641 = vunpack.c.l.b16 %v585
        %v642 = vunpack.c.l.b16 %v586
        %v643 = vpack.c.b16 %v624, %v623
        %v644 = vpack.c.b16 %v626, %v625
        %v645 = vpack.c.b16 %v628, %v627
        %v646 = vpack.c.b16 %v630, %v629
        %v647 = vpack.c.b16 %v632, %v631
        %v648 = vpack.c.b16 %v634, %v633
        %v649 = vpack.c.b16 %v636, %v635
        %v650 = vpack.c.b16 %v638, %v637
        %v651 = vpack.c.b16 %v640, %v639
        %v652 = vpack.c.b16 %v642, %v641
        %v679 = vunpack.c.l.b16 %v587
        %v680 = vunpack.c.l.b16 %v588
        %v681 = vunpack.c.l.b16 %v589
        %v682 = vunpack.c.l.b16 %v590
        %v683 = vunpack.c.l.b16 %v591
        %v684 = vunpack.c.l.b16 %v592
        %v685 = vunpack.c.l.b16 %v593
        %v686 = vunpack.c.l.b16 %v594
        %v687 = vunpack.c.l.b16 %v595
        %v688 = vunpack.c.l.b16 %v596
        %v689 = vunpack.c.l.b16 %v597
        %v690 = vunpack.c.l.b16 %v598
        %v691 = vunpack.c.l.b16 %v599
        %v692 = vunpack.c.l.b16 %v600
        %v693 = vunpack.c.l.b16 %v601
        %v694 = vunpack.c.l.b16 %v602
        %v695 = vpack.c.b16 %v680, %v679
        %v696 = vpack.c.b16 %v682, %v681
        %v697 = vpack.c.b16 %v684, %v683
        %v698 = vpack.c.b16 %v686, %v685
        %v699 = vpack.c.b16 %v688, %v687
        %v700 = vpack.c.b16 %v690, %v689
        %v701 = vpack.c.b16 %v692, %v691
        %v702 = vpack.c.b16 %v694, %v693
        %711 = vmatprep.subr.bf16.mxu0 0
        %712 = vmatpush1.bf16.msra.mxu0 %v695
        %713 = vmatprep.subr.bf16.mxu0 0
        %714 = vmatpush1.bf16.msra.mxu0 %v696
        %715 = vmatprep.subr.bf16.mxu0 0
        %716 = vmatpush1.bf16.msra.mxu0 %v697
        %717 = vmatprep.subr.bf16.mxu0 0
        %718 = vmatpush1.bf16.msra.mxu0 %v698
        %719 = vmatprep.subr.bf16.mxu0 0
        %720 = vmatpush1.bf16.msra.mxu0 %v699
        %721 = vmatprep.subr.bf16.mxu0 0
        %722 = vmatpush1.bf16.msra.mxu0 %v700
        %723 = vmatprep.subr.bf16.mxu0 0
        %724 = vmatpush1.bf16.msra.mxu0 %v701
        %725 = vmatprep.subr.bf16.mxu0 0
        %726 = vmatpush1.bf16.msra.mxu0 %v702
        %727 = vmatprep.subr.bf16.mxu0 0
        %728 = vmatpush1.bf16.msra.mxu0 0
        %729 = vmatprep.subr.bf16.mxu0 0
        %730 = vmatpush1.bf16.msra.mxu0 0
        %731 = vmatprep.subr.bf16.mxu0 0
        %732 = vmatpush1.bf16.msra.mxu0 0
        %733 = vmatprep.subr.bf16.mxu0 0
        %734 = vmatpush1.bf16.msra.mxu0 0
        %735 = vmatprep.subr.bf16.mxu0 0
        %736 = vmatpush1.bf16.msra.mxu0 0
        %737 = vmatprep.subr.bf16.mxu0 0
        %738 = vmatpush1.bf16.msra.mxu0 0
        %739 = vmatprep.subr.bf16.mxu0 0
        %740 = vmatpush1.bf16.msra.mxu0 0
        %741 = vmatprep.subr.bf16.mxu0 0
        %742 = vmatpush1.bf16.msra.mxu0 0
        %743 = vmatprep.mubr.bf16.mxu0 0
        %744 = vmatmul.mubr.bf16.gmra.mrb[0].mxu0 %v643
        %v745 = vpop.f32.mrb[0].mxu0
        %v746 = vadd.f32 0.0, %v745
        %v747 = vpop.f32.mrb[0].mxu0
        %v748 = vpop.f32.mrb[0].mxu0
        %v749 = vadd.f32 0.0, %v748
        %v750 = vpop.f32.mrb[0].mxu0
        %751 = vmatprep.mubr.bf16.mxu0 0
        %752 = vmatmul.mubr.bf16.gmra.mrb[0].mxu0 %v644
        %v753 = vpop.f32.mrb[0].mxu0
        %v754 = vadd.f32 0.0, %v753
        %v755 = vpop.f32.mrb[0].mxu0
        %v756 = vpop.f32.mrb[0].mxu0
        %v757 = vadd.f32 0.0, %v756
        %v758 = vpop.f32.mrb[0].mxu0
        %759 = vmatprep.mubr.bf16.mxu0 0
        %760 = vmatmul.mubr.bf16.gmra.mrb[0].mxu0 %v645
        %v761 = vpop.f32.mrb[0].mxu0
        %v762 = vadd.f32 0.0, %v761
        %v763 = vpop.f32.mrb[0].mxu0
        %v764 = vpop.f32.mrb[0].mxu0
        %v765 = vadd.f32 0.0, %v764
        %v766 = vpop.f32.mrb[0].mxu0
        %767 = vmatprep.mubr.bf16.mxu0 0
        %768 = vmatmul.mubr.bf16.gmra.mrb[0].mxu0 %v646
        %v769 = vpop.f32.mrb[0].mxu0
        %v770 = vadd.f32 0.0, %v769
        %v771 = vpop.f32.mrb[0].mxu0
        %v772 = vpop.f32.mrb[0].mxu0
        %v773 = vadd.f32 0.0, %v772
        %v774 = vpop.f32.mrb[0].mxu0
        %775 = vmatprep.mubr.bf16.mxu0 0
        %776 = vmatmul.mubr.bf16.gmra.mrb[0].mxu0 %v647
        %v777 = vpop.f32.mrb[0].mxu0
        %v778 = vadd.f32 0.0, %v777
        %v779 = vpop.f32.mrb[0].mxu0
        %v780 = vpop.f32.mrb[0].mxu0
        %v781 = vadd.f32 0.0, %v780
        %v782 = vpop.f32.mrb[0].mxu0
        %783 = vmatprep.mubr.bf16.mxu0 0
        %784 = vmatmul.mubr.bf16.gmra.mrb[0].mxu0 %v648
        %v785 = vpop.f32.mrb[0].mxu0
        %v786 = vadd.f32 0.0, %v785
        %v787 = vpop.f32.mrb[0].mxu0
        %v788 = vpop.f32.mrb[0].mxu0
        %v789 = vadd.f32 0.0, %v788
        %v790 = vpop.f32.mrb[0].mxu0
        %791 = vmatprep.mubr.bf16.mxu0 0
        %792 = vmatmul.mubr.bf16.gmra.mrb[0].mxu0 %v649
        %v793 = vpop.f32.mrb[0].mxu0
        %v794 = vadd.f32 0.0, %v793
        %v795 = vpop.f32.mrb[0].mxu0
        %v796 = vpop.f32.mrb[0].mxu0
        %v797 = vadd.f32 0.0, %v796
        %v798 = vpop.f32.mrb[0].mxu0
        %799 = vmatprep.mubr.bf16.mxu0 0
        %800 = vmatmul.mubr.bf16.gmra.mrb[0].mxu0 %v650
        %v801 = vpop.f32.mrb[0].mxu0
        %v802 = vadd.f32 0.0, %v801
        %v803 = vpop.f32.mrb[0].mxu0
        %v804 = vpop.f32.mrb[0].mxu0
        %v805 = vadd.f32 0.0, %v804
        %v806 = vpop.f32.mrb[0].mxu0
        %807 = vmatprep.mubr.bf16.mxu0 0
        %808 = vmatmul.mubr.bf16.gmra.mrb[0].mxu0 %v651
        %v809 = vpop.f32.mrb[0].mxu0
        %v810 = vadd.f32 0.0, %v809
        %v811 = vpop.f32.mrb[0].mxu0
        %v812 = vpop.f32.mrb[0].mxu0
        %v813 = vadd.f32 0.0, %v812
        %v814 = vpop.f32.mrb[0].mxu0
        %815 = vmatprep.mubr.bf16.mxu0 0
        %816 = vmatmul.mubr.bf16.gmra.mrb[0].mxu0 %v652
        %v817 = vpop.f32.mrb[0].mxu0
        %v818 = vadd.f32 0.0, %v817
        %v819 = vpop.f32.mrb[0].mxu0
        %v820 = vpop.f32.mrb[0].mxu0
        %v821 = vadd.f32 0.0, %v820
        %v822 = vpop.f32.mrb[0].mxu0
        %823 = vdwg.mxu0
        %v824 = vld [vmem:[%s4] sm:$0x1]
        %v826 = vlaneseq
        %v827 = vshrl.u32 %v826, 7
        %v828 = vsub.s32 0, %v827
        %v829 = vrot.slane %v824, %v828
        %v831 = vmul.f32 %v746, %v829
        %v832 = vmul.f32 %v749, %v829
        %v833 = vmul.f32 %v754, %v829
        %v834 = vmul.f32 %v757, %v829
        %v835 = vmul.f32 %v762, %v829
        %v836 = vmul.f32 %v765, %v829
        %v837 = vmul.f32 %v770, %v829
        %v838 = vmul.f32 %v773, %v829
        %v839 = vmul.f32 %v778, %v829
        %v840 = vmul.f32 %v781, %v829
        %v841 = vmul.f32 %v786, %v829
        %v842 = vmul.f32 %v789, %v829
        %v843 = vmul.f32 %v794, %v829
        %v844 = vmul.f32 %v797, %v829
        %v845 = vmul.f32 %v802, %v829
        %v846 = vmul.f32 %v805, %v829
        %v847 = vmul.f32 %v810, %v829
        %v848 = vmul.f32 %v813, %v829
        %v849 = vmul.f32 %v818, %v829
        %v850 = vmul.f32 %v821, %v829
        %v851 = vld [vmem:[%s5] sm:$0x1]
        %v853 = vlaneseq
        %v854 = vshrl.u32 %v853, 7
        %v855 = vsub.s32 0, %v854
        %v856 = vrot.slane %v851, %v855
        %v858 = vadd.f32 %v831, %v856
        %v859 = vadd.f32 %v832, %v856
        %v860 = vadd.f32 %v833, %v856
        %v861 = vadd.f32 %v834, %v856
        %v862 = vadd.f32 %v835, %v856
        %v863 = vadd.f32 %v836, %v856
        %v864 = vadd.f32 %v837, %v856
        %v865 = vadd.f32 %v838, %v856
        %v866 = vadd.f32 %v839, %v856
        %v867 = vadd.f32 %v840, %v856
        %v868 = vadd.f32 %v841, %v856
        %v869 = vadd.f32 %v842, %v856
        %v870 = vadd.f32 %v843, %v856
        %v871 = vadd.f32 %v844, %v856
        %v872 = vadd.f32 %v845, %v856
        %v873 = vadd.f32 %v846, %v856
        %v874 = vadd.f32 %v847, %v856
        %v875 = vadd.f32 %v848, %v856
        %v876 = vadd.f32 %v849, %v856
        %v877 = vadd.f32 %v850, %v856
        %v878 = vmax.f32 %v858, 0.0
        %v879 = vmax.f32 %v859, 0.0
        %v880 = vmax.f32 %v860, 0.0
        %v881 = vmax.f32 %v861, 0.0
        %v882 = vmax.f32 %v862, 0.0
        %v883 = vmax.f32 %v863, 0.0
        %v884 = vmax.f32 %v864, 0.0
        %v885 = vmax.f32 %v865, 0.0
        %v886 = vmax.f32 %v866, 0.0
        %v887 = vmax.f32 %v867, 0.0
        %v888 = vmax.f32 %v868, 0.0
        %v889 = vmax.f32 %v869, 0.0
        %v890 = vmax.f32 %v870, 0.0
        %v891 = vmax.f32 %v871, 0.0
        %v892 = vmax.f32 %v872, 0.0
        %v893 = vmax.f32 %v873, 0.0
        %v894 = vmax.f32 %v874, 0.0
        %v895 = vmax.f32 %v875, 0.0
        %v896 = vmax.f32 %v876, 0.0
        %v897 = vmax.f32 %v877, 0.0
        %p898 = scmp.eq.s32.totalorder %s37, 0
        %s899 = scalar_select %p898, 0.0, 1.0
        %p900 = scmp.eq.s32.totalorder %s37, 1
        %s901 = scalar_select %p900, 0.0, 1.0
        %v902 = vstv %s899
        %v903 = vmul.f32 %v878, %v902
        %v904 = vmul.f32 %v879, %v902
        %v905 = vstv %s901
        %v906 = vmul.f32 %v896, %v905
        %v907 = vmul.f32 %v897, %v905
        %vm928 = vcmask 1040384
        %v929 = vrot.slane %v903, 7
        %v930 = vrot.slane %v904, 7
        %v931 = vsel %vm928, %v929, %v930
        %v932 = vrot.slane %v880, 7
        %v933 = vrot.slane %v881, 7
        %v934 = vsel %vm928, %v932, %v933
        %v935 = vrot.slane %v882, 7
        %v936 = vrot.slane %v883, 7
        %v937 = vsel %vm928, %v935, %v936
        %v938 = vrot.slane %v884, 7
        %v939 = vrot.slane %v885, 7
        %v940 = vsel %vm928, %v938, %v939
        %v941 = vrot.slane %v886, 7
        %v942 = vrot.slane %v887, 7
        %v943 = vsel %vm928, %v941, %v942
        %v944 = vrot.slane %v888, 7
        %v945 = vrot.slane %v889, 7
        %v946 = vsel %vm928, %v944, %v945
        %v947 = vrot.slane %v890, 7
        %v948 = vrot.slane %v891, 7
        %v949 = vsel %vm928, %v947, %v948
        %v950 = vrot.slane %v892, 7
        %v951 = vrot.slane %v893, 7
        %v952 = vsel %vm928, %v950, %v951
        %v953 = vrot.slane %v894, 7
        %v954 = vrot.slane %v895, 7
        %v955 = vsel %vm928, %v953, %v954
        %v956 = vrot.slane %v906, 7
        %v957 = vrot.slane %v907, 7
        %v958 = vsel %vm928, %v956, %v957
        %v979 = vsel %vm928, 0.0, %v929
        %v980 = vsel %vm928, 0.0, %v932
        %v981 = vsel %vm928, 0.0, %v935
        %v982 = vsel %vm928, 0.0, %v938
        %v983 = vsel %vm928, 0.0, %v941
        %v984 = vsel %vm928, 0.0, %v944
        %v985 = vsel %vm928, 0.0, %v947
        %v986 = vsel %vm928, 0.0, %v950
        %v987 = vsel %vm928, 0.0, %v953
        %v988 = vsel %vm928, 0.0, %v956
        %vm989 = vcmask 1046528
        %v990 = vrot.slane %v903, 1
        %v991 = vrot.slane %v904, 1
        %v992 = vsel %vm989, %v990, %v991
        %v993 = vrot.slane %v880, 1
        %v994 = vrot.slane %v881, 1
        %v995 = vsel %vm989, %v993, %v994
        %v996 = vrot.slane %v882, 1
        %v997 = vrot.slane %v883, 1
        %v998 = vsel %vm989, %v996, %v997
        %v999 = vrot.slane %v884, 1
        %v1000 = vrot.slane %v885, 1
        %v1001 = vsel %vm989, %v999, %v1000
        %v1002 = vrot.slane %v886, 1
        %v1003 = vrot.slane %v887, 1
        %v1004 = vsel %vm989, %v1002, %v1003
        %v1005 = vrot.slane %v888, 1
        %v1006 = vrot.slane %v889, 1
        %v1007 = vsel %vm989, %v1005, %v1006
        %v1008 = vrot.slane %v890, 1
        %v1009 = vrot.slane %v891, 1
        %v1010 = vsel %vm989, %v1008, %v1009
        %v1011 = vrot.slane %v892, 1
        %v1012 = vrot.slane %v893, 1
        %v1013 = vsel %vm989, %v1011, %v1012
        %v1014 = vrot.slane %v894, 1
        %v1015 = vrot.slane %v895, 1
        %v1016 = vsel %vm989, %v1014, %v1015
        %v1017 = vrot.slane %v906, 1
        %v1018 = vrot.slane %v907, 1
        %v1019 = vsel %vm989, %v1017, %v1018
        %v1030 = vsel %vm989, %v991, 0.0
        %v1031 = vsel %vm989, %v994, 0.0
        %v1032 = vsel %vm989, %v997, 0.0
        %v1033 = vsel %vm989, %v1000, 0.0
        %v1034 = vsel %vm989, %v1003, 0.0
        %v1035 = vsel %vm989, %v1006, 0.0
        %v1036 = vsel %vm989, %v1009, 0.0
        %v1037 = vsel %vm989, %v1012, 0.0
        %v1038 = vsel %vm989, %v1015, 0.0
        %v1039 = vsel %vm989, %v1018, 0.0
        %1040 = vrot.lane.b32.xlu0 %v903, 32
        %v1041 = vpop.permute.xlu0 %1040
        %1042 = vrot.lane.b32.xlu0 %v904, 32
        %v1043 = vpop.permute.xlu0 %1042
        %1044 = vrot.lane.b32.xlu0 %v880, 32
        %v1045 = vpop.permute.xlu0 %1044
        %1046 = vrot.lane.b32.xlu0 %v881, 32
        %v1047 = vpop.permute.xlu0 %1046
        %1048 = vrot.lane.b32.xlu0 %v882, 32
        %v1049 = vpop.permute.xlu0 %1048
        %1050 = vrot.lane.b32.xlu0 %v883, 32
        %v1051 = vpop.permute.xlu0 %1050
        %1052 = vrot.lane.b32.xlu0 %v884, 32
        %v1053 = vpop.permute.xlu0 %1052
        %1054 = vrot.lane.b32.xlu0 %v885, 32
        %v1055 = vpop.permute.xlu0 %1054
        %1056 = vrot.lane.b32.xlu0 %v886, 32
        %v1057 = vpop.permute.xlu0 %1056
        %1058 = vrot.lane.b32.xlu0 %v887, 32
        %v1059 = vpop.permute.xlu0 %1058
        %1060 = vrot.lane.b32.xlu0 %v888, 32
        %v1061 = vpop.permute.xlu0 %1060
        %1062 = vrot.lane.b32.xlu0 %v889, 32
        %v1063 = vpop.permute.xlu0 %1062
        %1064 = vrot.lane.b32.xlu0 %v890, 32
        %v1065 = vpop.permute.xlu0 %1064
        %1066 = vrot.lane.b32.xlu0 %v891, 32
        %v1067 = vpop.permute.xlu0 %1066
        %1068 = vrot.lane.b32.xlu0 %v892, 32
        %v1069 = vpop.permute.xlu0 %1068
        %1070 = vrot.lane.b32.xlu0 %v893, 32
        %v1071 = vpop.permute.xlu0 %1070
        %1072 = vrot.lane.b32.xlu0 %v894, 32
        %v1073 = vpop.permute.xlu0 %1072
        %1074 = vrot.lane.b32.xlu0 %v895, 32
        %v1075 = vpop.permute.xlu0 %1074
        %1076 = vrot.lane.b32.xlu0 %v906, 32
        %v1077 = vpop.permute.xlu0 %1076
        %1078 = vrot.lane.b32.xlu0 %v907, 32
        %v1079 = vpop.permute.xlu0 %1078
        %1110 = vrot.lane.b32.xlu0 %v992, 64
        %v1111 = vpop.permute.xlu0 %1110
        %1112 = vrot.lane.b32.xlu0 %v1030, 64
        %v1113 = vpop.permute.xlu0 %1112
        %1114 = vrot.lane.b32.xlu0 %v995, 64
        %v1115 = vpop.permute.xlu0 %1114
        %1116 = vrot.lane.b32.xlu0 %v1031, 64
        %v1117 = vpop.permute.xlu0 %1116
        %1118 = vrot.lane.b32.xlu0 %v998, 64
        %v1119 = vpop.permute.xlu0 %1118
        %1120 = vrot.lane.b32.xlu0 %v1032, 64
        %v1121 = vpop.permute.xlu0 %1120
        %1122 = vrot.lane.b32.xlu0 %v1001, 64
        %v1123 = vpop.permute.xlu0 %1122
        %1124 = vrot.lane.b32.xlu0 %v1033, 64
        %v1125 = vpop.permute.xlu0 %1124
        %1126 = vrot.lane.b32.xlu0 %v1004, 64
        %v1127 = vpop.permute.xlu0 %1126
        %1128 = vrot.lane.b32.xlu0 %v1034, 64
        %v1129 = vpop.permute.xlu0 %1128
        %1130 = vrot.lane.b32.xlu0 %v1007, 64
        %v1131 = vpop.permute.xlu0 %1130
        %1132 = vrot.lane.b32.xlu0 %v1035, 64
        %v1133 = vpop.permute.xlu0 %1132
        %1134 = vrot.lane.b32.xlu0 %v1010, 64
        %v1135 = vpop.permute.xlu0 %1134
        %1136 = vrot.lane.b32.xlu0 %v1036, 64
        %v1137 = vpop.permute.xlu0 %1136
        %1138 = vrot.lane.b32.xlu0 %v1013, 64
        %v1139 = vpop.permute.xlu0 %1138
        %1140 = vrot.lane.b32.xlu0 %v1037, 64
        %v1141 = vpop.permute.xlu0 %1140
        %1142 = vrot.lane.b32.xlu0 %v1016, 64
        %v1143 = vpop.permute.xlu0 %1142
        %1144 = vrot.lane.b32.xlu0 %v1038, 64
        %v1145 = vpop.permute.xlu0 %1144
        %1146 = vrot.lane.b32.xlu0 %v1019, 64
        %v1147 = vpop.permute.xlu0 %1146
        %1148 = vrot.lane.b32.xlu0 %v1039, 64
        %v1149 = vpop.permute.xlu0 %1148
        %vm1170 = vcmask 261120
        %v1171 = vsel %vm1170, %v979, %v1041
        %v1172 = vsel %vm1170, %v931, %v1043
        %v1173 = vsel %vm1170, %v980, %v1045
        %v1174 = vsel %vm1170, %v934, %v1047
        %v1175 = vsel %vm1170, %v981, %v1049
        %v1176 = vsel %vm1170, %v937, %v1051
        %v1177 = vsel %vm1170, %v982, %v1053
        %v1178 = vsel %vm1170, %v940, %v1055
        %v1179 = vsel %vm1170, %v983, %v1057
        %v1180 = vsel %vm1170, %v943, %v1059
        %v1181 = vsel %vm1170, %v984, %v1061
        %v1182 = vsel %vm1170, %v946, %v1063
        %v1183 = vsel %vm1170, %v985, %v1065
        %v1184 = vsel %vm1170, %v949, %v1067
        %v1185 = vsel %vm1170, %v986, %v1069
        %v1186 = vsel %vm1170, %v952, %v1071
        %v1187 = vsel %vm1170, %v987, %v1073
        %v1188 = vsel %vm1170, %v955, %v1075
        %v1189 = vsel %vm1170, %v988, %v1077
        %v1190 = vsel %vm1170, %v958, %v1079
        %vm1191 = vcmask 523264
        %v1192 = vsel %vm1191, %v1171, %v1111
        %v1193 = vsel %vm1191, %v1172, %v1113
        %v1194 = vsel %vm1191, %v1173, %v1115
        %v1195 = vsel %vm1191, %v1174, %v1117
        %v1196 = vsel %vm1191, %v1175, %v1119
        %v1197 = vsel %vm1191, %v1176, %v1121
        %v1198 = vsel %vm1191, %v1177, %v1123
        %v1199 = vsel %vm1191, %v1178, %v1125
        %v1200 = vsel %vm1191, %v1179, %v1127
        %v1201 = vsel %vm1191, %v1180, %v1129
        %v1202 = vsel %vm1191, %v1181, %v1131
        %v1203 = vsel %vm1191, %v1182, %v1133
        %v1204 = vsel %vm1191, %v1183, %v1135
        %v1205 = vsel %vm1191, %v1184, %v1137
        %v1206 = vsel %vm1191, %v1185, %v1139
        %v1207 = vsel %vm1191, %v1186, %v1141
        %v1208 = vsel %vm1191, %v1187, %v1143
        %v1209 = vsel %vm1191, %v1188, %v1145
        %v1210 = vsel %vm1191, %v1189, %v1147
        %v1211 = vsel %vm1191, %v1190, %v1149
        %1228 = vrot.lane.b32.xlu0 %v1194, 96
        %v1229 = vpop.permute.xlu0 %1228
        %1230 = vrot.lane.b32.xlu0 %v1195, 96
        %v1231 = vpop.permute.xlu0 %1230
        %1232 = vrot.lane.b32.xlu0 %v1196, 96
        %v1233 = vpop.permute.xlu0 %1232
        %1234 = vrot.lane.b32.xlu0 %v1197, 96
        %v1235 = vpop.permute.xlu0 %1234
        %1236 = vrot.lane.b32.xlu0 %v1198, 96
        %v1237 = vpop.permute.xlu0 %1236
        %1238 = vrot.lane.b32.xlu0 %v1199, 96
        %v1239 = vpop.permute.xlu0 %1238
        %1240 = vrot.lane.b32.xlu0 %v1200, 96
        %v1241 = vpop.permute.xlu0 %1240
        %1242 = vrot.lane.b32.xlu0 %v1201, 96
        %v1243 = vpop.permute.xlu0 %1242
        %1244 = vrot.lane.b32.xlu0 %v1202, 96
        %v1245 = vpop.permute.xlu0 %1244
        %1246 = vrot.lane.b32.xlu0 %v1203, 96
        %v1247 = vpop.permute.xlu0 %1246
        %1248 = vrot.lane.b32.xlu0 %v1204, 96
        %v1249 = vpop.permute.xlu0 %1248
        %1250 = vrot.lane.b32.xlu0 %v1205, 96
        %v1251 = vpop.permute.xlu0 %1250
        %1252 = vrot.lane.b32.xlu0 %v1206, 96
        %v1253 = vpop.permute.xlu0 %1252
        %1254 = vrot.lane.b32.xlu0 %v1207, 96
        %v1255 = vpop.permute.xlu0 %1254
        %1256 = vrot.lane.b32.xlu0 %v1208, 96
        %v1257 = vpop.permute.xlu0 %1256
        %1258 = vrot.lane.b32.xlu0 %v1209, 96
        %v1259 = vpop.permute.xlu0 %1258
        %1278 = vrot.lane.b32.xlu0 %v1196, 64
        %v1279 = vpop.permute.xlu0 %1278
        %1280 = vrot.lane.b32.xlu0 %v1197, 64
        %v1281 = vpop.permute.xlu0 %1280
        %1282 = vrot.lane.b32.xlu0 %v1198, 64
        %v1283 = vpop.permute.xlu0 %1282
        %1284 = vrot.lane.b32.xlu0 %v1199, 64
        %v1285 = vpop.permute.xlu0 %1284
        %1286 = vrot.lane.b32.xlu0 %v1200, 64
        %v1287 = vpop.permute.xlu0 %1286
        %1288 = vrot.lane.b32.xlu0 %v1201, 64
        %v1289 = vpop.permute.xlu0 %1288
        %1290 = vrot.lane.b32.xlu0 %v1202, 64
        %v1291 = vpop.permute.xlu0 %1290
        %1292 = vrot.lane.b32.xlu0 %v1203, 64
        %v1293 = vpop.permute.xlu0 %1292
        %1294 = vrot.lane.b32.xlu0 %v1204, 64
        %v1295 = vpop.permute.xlu0 %1294
        %1296 = vrot.lane.b32.xlu0 %v1205, 64
        %v1297 = vpop.permute.xlu0 %1296
        %1298 = vrot.lane.b32.xlu0 %v1206, 64
        %v1299 = vpop.permute.xlu0 %1298
        %1300 = vrot.lane.b32.xlu0 %v1207, 64
        %v1301 = vpop.permute.xlu0 %1300
        %1302 = vrot.lane.b32.xlu0 %v1208, 64
        %v1303 = vpop.permute.xlu0 %1302
        %1304 = vrot.lane.b32.xlu0 %v1209, 64
        %v1305 = vpop.permute.xlu0 %1304
        %1306 = vrot.lane.b32.xlu0 %v1210, 64
        %v1307 = vpop.permute.xlu0 %1306
        %1308 = vrot.lane.b32.xlu0 %v1211, 64
        %v1309 = vpop.permute.xlu0 %1308
        %vm1326 = vcmask 785408
        %v1327 = vsel %vm1326, %v1192, %v1229
        %v1328 = vsel %vm1326, %v1193, %v1231
        %v1329 = vsel %vm1326, %v1194, %v1233
        %v1330 = vsel %vm1326, %v1195, %v1235
        %v1331 = vsel %vm1326, %v1196, %v1237
        %v1332 = vsel %vm1326, %v1197, %v1239
        %v1333 = vsel %vm1326, %v1198, %v1241
        %v1334 = vsel %vm1326, %v1199, %v1243
        %v1335 = vsel %vm1326, %v1200, %v1245
        %v1336 = vsel %vm1326, %v1201, %v1247
        %v1337 = vsel %vm1326, %v1202, %v1249
        %v1338 = vsel %vm1326, %v1203, %v1251
        %v1339 = vsel %vm1326, %v1204, %v1253
        %v1340 = vsel %vm1326, %v1205, %v1255
        %v1341 = vsel %vm1326, %v1206, %v1257
        %v1342 = vsel %vm1326, %v1207, %v1259
        %v1343 = vsel %vm1191, %v1229, %v1279
        %v1344 = vsel %vm1191, %v1231, %v1281
        %v1345 = vsel %vm1191, %v1233, %v1283
        %v1346 = vsel %vm1191, %v1235, %v1285
        %v1347 = vsel %vm1191, %v1237, %v1287
        %v1348 = vsel %vm1191, %v1239, %v1289
        %v1349 = vsel %vm1191, %v1241, %v1291
        %v1350 = vsel %vm1191, %v1243, %v1293
        %v1351 = vsel %vm1191, %v1245, %v1295
        %v1352 = vsel %vm1191, %v1247, %v1297
        %v1353 = vsel %vm1191, %v1249, %v1299
        %v1354 = vsel %vm1191, %v1251, %v1301
        %v1355 = vsel %vm1191, %v1253, %v1303
        %v1356 = vsel %vm1191, %v1255, %v1305
        %v1357 = vsel %vm1191, %v1257, %v1307
        %v1358 = vsel %vm1191, %v1259, %v1309
        %v1359 = vpack.c.bf16 %v1328, %v1327
        %v1360 = vpack.c.bf16 %v1344, %v1343
        %v1361 = vpack.c.bf16 %v1281, %v1279
        %v1362 = vpack.c.bf16 %v1330, %v1329
        %v1363 = vpack.c.bf16 %v1346, %v1345
        %v1364 = vpack.c.bf16 %v1285, %v1283
        %v1365 = vpack.c.bf16 %v1332, %v1331
        %v1366 = vpack.c.bf16 %v1348, %v1347
        %v1367 = vpack.c.bf16 %v1289, %v1287
        %v1368 = vpack.c.bf16 %v1334, %v1333
        %v1369 = vpack.c.bf16 %v1350, %v1349
        %v1370 = vpack.c.bf16 %v1293, %v1291
        %v1371 = vpack.c.bf16 %v1336, %v1335
        %v1372 = vpack.c.bf16 %v1352, %v1351
        %v1373 = vpack.c.bf16 %v1297, %v1295
        %v1374 = vpack.c.bf16 %v1338, %v1337
        %v1375 = vpack.c.bf16 %v1354, %v1353
        %v1376 = vpack.c.bf16 %v1301, %v1299
        %v1377 = vpack.c.bf16 %v1340, %v1339
        %v1378 = vpack.c.bf16 %v1356, %v1355
        %v1379 = vpack.c.bf16 %v1305, %v1303
        %v1380 = vpack.c.bf16 %v1342, %v1341
        %v1381 = vpack.c.bf16 %v1358, %v1357
        %v1382 = vpack.c.bf16 %v1309, %v1307
        %v1383 = vld [vmem:[%s6] sm:$0xf]
        %v1384 = vld [vmem:[%s6 + $0x4] sm:$0xf]
        %v1385 = vld [vmem:[%s6 + $0x8] sm:$0xf]
        %v1386 = vld [vmem:[%s6 + $0xc] sm:$0xf]
        %v1387 = vld [vmem:[%s6 + $0x10] sm:$0xf]
        %v1388 = vld [vmem:[%s6 + $0x14] sm:$0xf]
        %v1389 = vld [vmem:[%s6 + $0x18] sm:$0xf]
        %v1390 = vld [vmem:[%s6 + $0x1c] sm:$0xf]
        %v1391 = vld [vmem:[%s6 + $0x20] sm:$0xf]
        %v1392 = vld [vmem:[%s6 + $0x24] sm:$0xf]
        %v1393 = vld [vmem:[%s6 + $0x28] sm:$0xf]
        %v1394 = vld [vmem:[%s6 + $0x2c] sm:$0xf]
        %v1395 = vld [vmem:[%s6 + $0x30] sm:$0xf]
        %v1396 = vld [vmem:[%s6 + $0x34] sm:$0xf]
        %v1397 = vld [vmem:[%s6 + $0x38] sm:$0xf]
        %v1398 = vld [vmem:[%s6 + $0x3c] sm:$0xf]
        %v1399 = vld [vmem:[%s6 + $0x40] sm:$0xf]
        %v1400 = vld [vmem:[%s6 + $0x44] sm:$0xf]
        %v1401 = vld [vmem:[%s6 + $0x48] sm:$0xf]
        %v1402 = vld [vmem:[%s6 + $0x4c] sm:$0xf]
        %v1403 = vld [vmem:[%s6 + $0x50] sm:$0xf]
        %v1404 = vld [vmem:[%s6 + $0x54] sm:$0xf]
        %v1405 = vld [vmem:[%s6 + $0x58] sm:$0xf]
        %v1406 = vld [vmem:[%s6 + $0x5c] sm:$0xf]
        %v1407 = vld [vmem:[%s6 + $0x60] sm:$0xf]
        %v1408 = vld [vmem:[%s6 + $0x64] sm:$0xf]
        %v1409 = vld [vmem:[%s6 + $0x68] sm:$0xf]
        %v1410 = vld [vmem:[%s6 + $0x6c] sm:$0xf]
        %v1411 = vld [vmem:[%s6 + $0x70] sm:$0xf]
        %v1412 = vld [vmem:[%s6 + $0x74] sm:$0xf]
        %v1413 = vld [vmem:[%s6 + $0x78] sm:$0xf]
        %v1414 = vld [vmem:[%s6 + $0x7c] sm:$0xf]
        %v1415 = vld [vmem:[%s6 + $0x80] sm:$0xf]
        %v1416 = vld [vmem:[%s6 + $0x84] sm:$0xf]
        %v1417 = vld [vmem:[%s6 + $0x88] sm:$0xf]
        %v1418 = vld [vmem:[%s6 + $0x8c] sm:$0xf]
        %v1455 = vunpack.c.l.b16 %v1383
        %v1456 = vunpack.c.l.b16 %v1384
        %v1457 = vunpack.c.l.b16 %v1385
        %v1458 = vunpack.c.l.b16 %v1386
        %v1459 = vunpack.c.l.b16 %v1387
        %v1460 = vunpack.c.l.b16 %v1388
        %v1461 = vunpack.c.l.b16 %v1389
        %v1462 = vunpack.c.l.b16 %v1390
        %v1463 = vunpack.c.l.b16 %v1391
        %v1464 = vunpack.c.l.b16 %v1392
        %v1465 = vunpack.c.l.b16 %v1393
        %v1466 = vunpack.c.l.b16 %v1394
        %v1467 = vunpack.c.l.b16 %v1395
        %v1468 = vunpack.c.l.b16 %v1396
        %v1469 = vunpack.c.l.b16 %v1397
        %v1470 = vunpack.c.l.b16 %v1398
        %v1471 = vunpack.c.l.b16 %v1399
        %v1472 = vunpack.c.l.b16 %v1400
        %v1473 = vunpack.c.l.b16 %v1401
        %v1474 = vunpack.c.l.b16 %v1402
        %v1475 = vunpack.c.l.b16 %v1403
        %v1476 = vunpack.c.l.b16 %v1404
        %v1477 = vunpack.c.l.b16 %v1405
        %v1478 = vunpack.c.l.b16 %v1406
        %v1479 = vunpack.c.l.b16 %v1407
        %v1480 = vunpack.c.l.b16 %v1408
        %v1481 = vunpack.c.l.b16 %v1409
        %v1482 = vunpack.c.l.b16 %v1410
        %v1483 = vunpack.c.l.b16 %v1411
        %v1484 = vunpack.c.l.b16 %v1412
        %v1485 = vunpack.c.l.b16 %v1413
        %v1486 = vunpack.c.l.b16 %v1414
        %v1487 = vunpack.c.l.b16 %v1415
        %v1488 = vunpack.c.l.b16 %v1416
        %v1489 = vunpack.c.l.b16 %v1417
        %v1490 = vunpack.c.l.b16 %v1418
        %v1491 = vpack.c.b16 %v1456, %v1455
        %v1492 = vpack.c.b16 %v1458, %v1457
        %v1493 = vpack.c.b16 %v1460, %v1459
        %v1494 = vpack.c.b16 %v1462, %v1461
        %v1495 = vpack.c.b16 %v1464, %v1463
        %v1496 = vpack.c.b16 %v1466, %v1465
        %v1497 = vpack.c.b16 %v1468, %v1467
        %v1498 = vpack.c.b16 %v1470, %v1469
        %v1499 = vpack.c.b16 %v1472, %v1471
        %v1500 = vpack.c.b16 %v1474, %v1473
        %v1501 = vpack.c.b16 %v1476, %v1475
        %v1502 = vpack.c.b16 %v1478, %v1477
        %v1503 = vpack.c.b16 %v1480, %v1479
        %v1504 = vpack.c.b16 %v1482, %v1481
        %v1505 = vpack.c.b16 %v1484, %v1483
        %v1506 = vpack.c.b16 %v1486, %v1485
        %v1507 = vpack.c.b16 %v1488, %v1487
        %v1508 = vpack.c.b16 %v1490, %v1489
        %v1528 = vsel %vm1170, %v1361, 0
        %v1531 = vsel %vm1170, %v1364, 0
        %v1534 = vsel %vm1170, %v1367, 0
        %v1537 = vsel %vm1170, %v1370, 0
        %v1540 = vsel %vm1170, %v1373, 0
        %v1543 = vsel %vm1170, %v1376, 0
        %v1546 = vsel %vm1170, %v1379, 0
        %v1549 = vsel %vm1170, %v1382, 0
        %1551 = vmatprep.subr.bf16.mxu0 0
        %1552 = vmatpush1.bf16.msra.mxu0 %v1491
        %1553 = vmatprep.subr.bf16.mxu0 0
        %1554 = vmatpush1.bf16.msra.mxu0 %v1492
        %1555 = vmatprep.subr.bf16.mxu0 0
        %1556 = vmatpush1.bf16.msra.mxu0 %v1493
        %1557 = vmatprep.subr.bf16.mxu0 0
        %1558 = vmatpush1.bf16.msra.mxu0 %v1494
        %1559 = vmatprep.subr.bf16.mxu0 0
        %1560 = vmatpush1.bf16.msra.mxu0 %v1495
        %1561 = vmatprep.subr.bf16.mxu0 0
        %1562 = vmatpush1.bf16.msra.mxu0 %v1496
        %1563 = vmatprep.subr.bf16.mxu0 0
        %1564 = vmatpush1.bf16.msra.mxu0 %v1497
        %1565 = vmatprep.subr.bf16.mxu0 0
        %1566 = vmatpush1.bf16.msra.mxu0 %v1498
        %1567 = vmatprep.subr.bf16.mxu0 0
        %1568 = vmatpush1.bf16.msra.mxu0 %v1499
        %1569 = vmatprep.subr.bf16.mxu0 0
        %1570 = vmatpush1.bf16.msra.mxu0 %v1500
        %1571 = vmatprep.subr.bf16.mxu0 0
        %1572 = vmatpush1.bf16.msra.mxu0 %v1501
        %1573 = vmatprep.subr.bf16.mxu0 0
        %1574 = vmatpush1.bf16.msra.mxu0 %v1502
        %1575 = vmatprep.subr.bf16.mxu0 0
        %1576 = vmatpush1.bf16.msra.mxu0 %v1503
        %1577 = vmatprep.subr.bf16.mxu0 0
        %1578 = vmatpush1.bf16.msra.mxu0 %v1504
        %1579 = vmatprep.subr.bf16.mxu0 0
        %1580 = vmatpush1.bf16.msra.mxu0 %v1505
        %1581 = vmatprep.subr.bf16.mxu0 0
        %1582 = vmatpush1.bf16.msra.mxu0 %v1506
        %1583 = vmatprep.mubr.bf16.mxu0 %v1360
        %1584 = vmatmul.mubr.bf16.gmra.mrb[0].mxu0 %v1359
        %v1585 = vpop.f32.mrb[0].mxu0
        %v1586 = vadd.f32 0.0, %v1585
        %v1587 = vpop.f32.mrb[0].mxu0
        %v1588 = vpop.f32.mrb[0].mxu0
        %v1589 = vadd.f32 0.0, %v1588
        %v1590 = vpop.f32.mrb[0].mxu0
        %1591 = vmatprep.mubr.bf16.mxu0 %v1363
        %1592 = vmatmul.mubr.bf16.gmra.mrb[0].mxu0 %v1362
        %v1593 = vpop.f32.mrb[0].mxu0
        %v1594 = vadd.f32 0.0, %v1593
        %v1595 = vpop.f32.mrb[0].mxu0
        %v1596 = vpop.f32.mrb[0].mxu0
        %v1597 = vadd.f32 0.0, %v1596
        %v1598 = vpop.f32.mrb[0].mxu0
        %1599 = vmatprep.mubr.bf16.mxu0 %v1366
        %1600 = vmatmul.mubr.bf16.gmra.mrb[0].mxu0 %v1365
        %v1601 = vpop.f32.mrb[0].mxu0
        %v1602 = vadd.f32 0.0, %v1601
        %v1603 = vpop.f32.mrb[0].mxu0
        %v1604 = vpop.f32.mrb[0].mxu0
        %v1605 = vadd.f32 0.0, %v1604
        %v1606 = vpop.f32.mrb[0].mxu0
        %1607 = vmatprep.mubr.bf16.mxu0 %v1369
        %1608 = vmatmul.mubr.bf16.gmra.mrb[0].mxu0 %v1368
        %v1609 = vpop.f32.mrb[0].mxu0
        %v1610 = vadd.f32 0.0, %v1609
        %v1611 = vpop.f32.mrb[0].mxu0
        %v1612 = vpop.f32.mrb[0].mxu0
        %v1613 = vadd.f32 0.0, %v1612
        %v1614 = vpop.f32.mrb[0].mxu0
        %1615 = vmatprep.mubr.bf16.mxu0 %v1372
        %1616 = vmatmul.mubr.bf16.gmra.mrb[0].mxu0 %v1371
        %v1617 = vpop.f32.mrb[0].mxu0
        %v1618 = vadd.f32 0.0, %v1617
        %v1619 = vpop.f32.mrb[0].mxu0
        %v1620 = vpop.f32.mrb[0].mxu0
        %v1621 = vadd.f32 0.0, %v1620
        %v1622 = vpop.f32.mrb[0].mxu0
        %1623 = vmatprep.mubr.bf16.mxu0 %v1375
        %1624 = vmatmul.mubr.bf16.gmra.mrb[0].mxu0 %v1374
        %v1625 = vpop.f32.mrb[0].mxu0
        %v1626 = vadd.f32 0.0, %v1625
        %v1627 = vpop.f32.mrb[0].mxu0
        %v1628 = vpop.f32.mrb[0].mxu0
        %v1629 = vadd.f32 0.0, %v1628
        %v1630 = vpop.f32.mrb[0].mxu0
        %1631 = vmatprep.mubr.bf16.mxu0 %v1378
        %1632 = vmatmul.mubr.bf16.gmra.mrb[0].mxu0 %v1377
        %v1633 = vpop.f32.mrb[0].mxu0
        %v1634 = vadd.f32 0.0, %v1633
        %v1635 = vpop.f32.mrb[0].mxu0
        %v1636 = vpop.f32.mrb[0].mxu0
        %v1637 = vadd.f32 0.0, %v1636
        %v1638 = vpop.f32.mrb[0].mxu0
        %1639 = vmatprep.mubr.bf16.mxu0 %v1381
        %1640 = vmatmul.mubr.bf16.gmra.mrb[0].mxu0 %v1380
        %v1641 = vpop.f32.mrb[0].mxu0
        %v1642 = vadd.f32 0.0, %v1641
        %v1643 = vpop.f32.mrb[0].mxu0
        %v1644 = vpop.f32.mrb[0].mxu0
        %v1645 = vadd.f32 0.0, %v1644
        %v1646 = vpop.f32.mrb[0].mxu0
        %1647 = vdwg.mxu0
        %1648 = vmatprep.subr.bf16.mxu0 0
        %1649 = vmatpush1.bf16.msra.mxu0 %v1507
        %1650 = vmatprep.subr.bf16.mxu0 0
        %1651 = vmatpush1.bf16.msra.mxu0 %v1508
        %1652 = vmatprep.subr.bf16.mxu0 0
        %1653 = vmatpush1.bf16.msra.mxu0 0
        %1654 = vmatprep.subr.bf16.mxu0 0
        %1655 = vmatpush1.bf16.msra.mxu0 0
        %1656 = vmatprep.subr.bf16.mxu0 0
        %1657 = vmatpush1.bf16.msra.mxu0 0
        %1658 = vmatprep.subr.bf16.mxu0 0
        %1659 = vmatpush1.bf16.msra.mxu0 0
        %1660 = vmatprep.subr.bf16.mxu0 0
        %1661 = vmatpush1.bf16.msra.mxu0 0
        %1662 = vmatprep.subr.bf16.mxu0 0
        %1663 = vmatpush1.bf16.msra.mxu0 0
        %1664 = vmatprep.subr.bf16.mxu0 0
        %1665 = vmatpush1.bf16.msra.mxu0 0
        %1666 = vmatprep.subr.bf16.mxu0 0
        %1667 = vmatpush1.bf16.msra.mxu0 0
        %1668 = vmatprep.subr.bf16.mxu0 0
        %1669 = vmatpush1.bf16.msra.mxu0 0
        %1670 = vmatprep.subr.bf16.mxu0 0
        %1671 = vmatpush1.bf16.msra.mxu0 0
        %1672 = vmatprep.subr.bf16.mxu0 0
        %1673 = vmatpush1.bf16.msra.mxu0 0
        %1674 = vmatprep.subr.bf16.mxu0 0
        %1675 = vmatpush1.bf16.msra.mxu0 0
        %1676 = vmatprep.subr.bf16.mxu0 0
        %1677 = vmatpush1.bf16.msra.mxu0 0
        %1678 = vmatprep.subr.bf16.mxu0 0
        %1679 = vmatpush1.bf16.msra.mxu0 0
        %1680 = vmatprep.mubr.bf16.mxu0 0
        %1681 = vmatmul.mubr.bf16.gmra.mrb[0].mxu0 %v1528
        %v1682 = vpop.f32.mrb[0].mxu0
        %v1683 = vadd.f32 %v1586, %v1682
        %v1684 = vpop.f32.mrb[0].mxu0
        %v1685 = vpop.f32.mrb[0].mxu0
        %v1686 = vadd.f32 %v1589, %v1685
        %v1687 = vpop.f32.mrb[0].mxu0
        %1688 = vmatprep.mubr.bf16.mxu0 0
        %1689 = vmatmul.mubr.bf16.gmra.mrb[0].mxu0 %v1531
        %v1690 = vpop.f32.mrb[0].mxu0
        %v1691 = vadd.f32 %v1594, %v1690
        %v1692 = vpop.f32.mrb[0].mxu0
        %v1693 = vpop.f32.mrb[0].mxu0
        %v1694 = vadd.f32 %v1597, %v1693
        %v1695 = vpop.f32.mrb[0].mxu0
        %1696 = vmatprep.mubr.bf16.mxu0 0
        %1697 = vmatmul.mubr.bf16.gmra.mrb[0].mxu0 %v1534
        %v1698 = vpop.f32.mrb[0].mxu0
        %v1699 = vadd.f32 %v1602, %v1698
        %v1700 = vpop.f32.mrb[0].mxu0
        %v1701 = vpop.f32.mrb[0].mxu0
        %v1702 = vadd.f32 %v1605, %v1701
        %v1703 = vpop.f32.mrb[0].mxu0
        %1704 = vmatprep.mubr.bf16.mxu0 0
        %1705 = vmatmul.mubr.bf16.gmra.mrb[0].mxu0 %v1537
        %v1706 = vpop.f32.mrb[0].mxu0
        %v1707 = vadd.f32 %v1610, %v1706
        %v1708 = vpop.f32.mrb[0].mxu0
        %v1709 = vpop.f32.mrb[0].mxu0
        %v1710 = vadd.f32 %v1613, %v1709
        %v1711 = vpop.f32.mrb[0].mxu0
        %1712 = vmatprep.mubr.bf16.mxu0 0
        %1713 = vmatmul.mubr.bf16.gmra.mrb[0].mxu0 %v1540
        %v1714 = vpop.f32.mrb[0].mxu0
        %v1715 = vadd.f32 %v1618, %v1714
        %v1716 = vpop.f32.mrb[0].mxu0
        %v1717 = vpop.f32.mrb[0].mxu0
        %v1718 = vadd.f32 %v1621, %v1717
        %v1719 = vpop.f32.mrb[0].mxu0
        %1720 = vmatprep.mubr.bf16.mxu0 0
        %1721 = vmatmul.mubr.bf16.gmra.mrb[0].mxu0 %v1543
        %v1722 = vpop.f32.mrb[0].mxu0
        %v1723 = vadd.f32 %v1626, %v1722
        %v1724 = vpop.f32.mrb[0].mxu0
        %v1725 = vpop.f32.mrb[0].mxu0
        %v1726 = vadd.f32 %v1629, %v1725
        %v1727 = vpop.f32.mrb[0].mxu0
        %1728 = vmatprep.mubr.bf16.mxu0 0
        %1729 = vmatmul.mubr.bf16.gmra.mrb[0].mxu0 %v1546
        %v1730 = vpop.f32.mrb[0].mxu0
        %v1731 = vadd.f32 %v1634, %v1730
        %v1732 = vpop.f32.mrb[0].mxu0
        %v1733 = vpop.f32.mrb[0].mxu0
        %v1734 = vadd.f32 %v1637, %v1733
        %v1735 = vpop.f32.mrb[0].mxu0
        %1736 = vmatprep.mubr.bf16.mxu0 0
        %1737 = vmatmul.mubr.bf16.gmra.mrb[0].mxu0 %v1549
        %v1738 = vpop.f32.mrb[0].mxu0
        %v1739 = vadd.f32 %v1642, %v1738
        %v1740 = vpop.f32.mrb[0].mxu0
        %v1741 = vpop.f32.mrb[0].mxu0
        %v1742 = vadd.f32 %v1645, %v1741
        %v1743 = vpop.f32.mrb[0].mxu0
        %1744 = vdwg.mxu0
        %v1745 = vld [vmem:[%s7] sm:$0x1]
        %v1747 = vlaneseq
        %v1748 = vshrl.u32 %v1747, 7
        %v1749 = vsub.s32 0, %v1748
        %v1750 = vrot.slane %v1745, %v1749
        %v1752 = vmul.f32 %v1683, %v1750
        %v1753 = vmul.f32 %v1686, %v1750
        %v1754 = vmul.f32 %v1691, %v1750
        %v1755 = vmul.f32 %v1694, %v1750
        %v1756 = vmul.f32 %v1699, %v1750
        %v1757 = vmul.f32 %v1702, %v1750
        %v1758 = vmul.f32 %v1707, %v1750
        %v1759 = vmul.f32 %v1710, %v1750
        %v1760 = vmul.f32 %v1715, %v1750
        %v1761 = vmul.f32 %v1718, %v1750
        %v1762 = vmul.f32 %v1723, %v1750
        %v1763 = vmul.f32 %v1726, %v1750
        %v1764 = vmul.f32 %v1731, %v1750
        %v1765 = vmul.f32 %v1734, %v1750
        %v1766 = vmul.f32 %v1739, %v1750
        %v1767 = vmul.f32 %v1742, %v1750
        %v1768 = vld [vmem:[%s8] sm:$0x1]
        %v1770 = vlaneseq
        %v1771 = vshrl.u32 %v1770, 7
        %v1772 = vsub.s32 0, %v1771
        %v1773 = vrot.slane %v1768, %v1772
        %v1775 = vadd.f32 %v1752, %v1773
        %v1776 = vadd.f32 %v1753, %v1773
        %v1777 = vadd.f32 %v1754, %v1773
        %v1778 = vadd.f32 %v1755, %v1773
        %v1779 = vadd.f32 %v1756, %v1773
        %v1780 = vadd.f32 %v1757, %v1773
        %v1781 = vadd.f32 %v1758, %v1773
        %v1782 = vadd.f32 %v1759, %v1773
        %v1783 = vadd.f32 %v1760, %v1773
        %v1784 = vadd.f32 %v1761, %v1773
        %v1785 = vadd.f32 %v1762, %v1773
        %v1786 = vadd.f32 %v1763, %v1773
        %v1787 = vadd.f32 %v1764, %v1773
        %v1788 = vadd.f32 %v1765, %v1773
        %v1789 = vadd.f32 %v1766, %v1773
        %v1790 = vadd.f32 %v1767, %v1773
        %v1791 = vmax.f32 %v1775, 0.0
        %v1792 = vmax.f32 %v1776, 0.0
        %v1793 = vmax.f32 %v1777, 0.0
        %v1794 = vmax.f32 %v1778, 0.0
        %v1795 = vmax.f32 %v1779, 0.0
        %v1796 = vmax.f32 %v1780, 0.0
        %v1797 = vmax.f32 %v1781, 0.0
        %v1798 = vmax.f32 %v1782, 0.0
        %v1799 = vmax.f32 %v1783, 0.0
        %v1800 = vmax.f32 %v1784, 0.0
        %v1801 = vmax.f32 %v1785, 0.0
        %v1802 = vmax.f32 %v1786, 0.0
        %v1803 = vmax.f32 %v1787, 0.0
        %v1804 = vmax.f32 %v1788, 0.0
        %v1805 = vmax.f32 %v1789, 0.0
        %v1806 = vmax.f32 %v1790, 0.0
        %v1807 = vpack.c.bf16 %v1792, %v1791
        %v1808 = vpack.c.bf16 %v1794, %v1793
        %v1809 = vpack.c.bf16 %v1796, %v1795
        %v1810 = vpack.c.bf16 %v1798, %v1797
        %v1811 = vpack.c.bf16 %v1800, %v1799
        %v1812 = vpack.c.bf16 %v1802, %v1801
        %v1813 = vpack.c.bf16 %v1804, %v1803
        %v1814 = vpack.c.bf16 %v1806, %v1805
        %v1815 = vld [vmem:[%s9] sm:$0xf]
        %v1816 = vld [vmem:[%s9 + $0x4] sm:$0xf]
        %v1817 = vld [vmem:[%s9 + $0x8] sm:$0xf]
        %v1818 = vld [vmem:[%s9 + $0xc] sm:$0xf]
        %v1823 = vunpack.c.l.b16 %v1815
        %v1824 = vunpack.c.l.b16 %v1816
        %v1825 = vunpack.c.l.b16 %v1817
        %v1826 = vunpack.c.l.b16 %v1818
        %v1827 = vpack.c.b16 %v1824, %v1823
        %v1828 = vpack.c.b16 %v1826, %v1825
        %v1832 = vsel %vm1170, %v1807, 0
        %v1835 = vsel %vm1170, %v1808, 0
        %v1838 = vsel %vm1170, %v1809, 0
        %v1841 = vsel %vm1170, %v1810, 0
        %v1844 = vsel %vm1170, %v1811, 0
        %v1847 = vsel %vm1170, %v1812, 0
        %v1850 = vsel %vm1170, %v1813, 0
        %v1853 = vsel %vm1170, %v1814, 0
        %1855 = vmatprep.subr.bf16.mxu0 0
        %1856 = vmatpush1.bf16.msra.mxu0 %v1827
        %1857 = vmatprep.subr.bf16.mxu0 0
        %1858 = vmatpush1.bf16.msra.mxu0 %v1828
        %1859 = vmatprep.subr.bf16.mxu0 0
        %1860 = vmatpush1.bf16.msra.mxu0 0
        %1861 = vmatprep.subr.bf16.mxu0 0
        %1862 = vmatpush1.bf16.msra.mxu0 0
        %1863 = vmatprep.subr.bf16.mxu0 0
        %1864 = vmatpush1.bf16.msra.mxu0 0
        %1865 = vmatprep.subr.bf16.mxu0 0
        %1866 = vmatpush1.bf16.msra.mxu0 0
        %1867 = vmatprep.subr.bf16.mxu0 0
        %1868 = vmatpush1.bf16.msra.mxu0 0
        %1869 = vmatprep.subr.bf16.mxu0 0
        %1870 = vmatpush1.bf16.msra.mxu0 0
        %1871 = vmatprep.subr.bf16.mxu0 0
        %1872 = vmatpush1.bf16.msra.mxu0 0
        %1873 = vmatprep.subr.bf16.mxu0 0
        %1874 = vmatpush1.bf16.msra.mxu0 0
        %1875 = vmatprep.subr.bf16.mxu0 0
        %1876 = vmatpush1.bf16.msra.mxu0 0
        %1877 = vmatprep.subr.bf16.mxu0 0
        %1878 = vmatpush1.bf16.msra.mxu0 0
        %1879 = vmatprep.subr.bf16.mxu0 0
        %1880 = vmatpush1.bf16.msra.mxu0 0
        %1881 = vmatprep.subr.bf16.mxu0 0
        %1882 = vmatpush1.bf16.msra.mxu0 0
        %1883 = vmatprep.subr.bf16.mxu0 0
        %1884 = vmatpush1.bf16.msra.mxu0 0
        %1885 = vmatprep.subr.bf16.mxu0 0
        %1886 = vmatpush1.bf16.msra.mxu0 0
        %1887 = vmatprep.mubr.bf16.mxu0 0
        %1888 = vmatmul.mubr.bf16.gmra.mrb[0].mxu0 %v1832
        %v1889 = vpop.f32.mrb[0].mxu0
        %v1890 = vadd.f32 0.0, %v1889
        %v1891 = vpop.f32.mrb[0].mxu0
        %v1892 = vpop.f32.mrb[0].mxu0
        %v1893 = vadd.f32 0.0, %v1892
        %v1894 = vpop.f32.mrb[0].mxu0
        %1895 = vmatprep.mubr.bf16.mxu0 0
        %1896 = vmatmul.mubr.bf16.gmra.mrb[0].mxu0 %v1835
        %v1897 = vpop.f32.mrb[0].mxu0
        %v1898 = vadd.f32 0.0, %v1897
        %v1899 = vpop.f32.mrb[0].mxu0
        %v1900 = vpop.f32.mrb[0].mxu0
        %v1901 = vadd.f32 0.0, %v1900
        %v1902 = vpop.f32.mrb[0].mxu0
        %1903 = vmatprep.mubr.bf16.mxu0 0
        %1904 = vmatmul.mubr.bf16.gmra.mrb[0].mxu0 %v1838
        %v1905 = vpop.f32.mrb[0].mxu0
        %v1906 = vadd.f32 0.0, %v1905
        %v1907 = vpop.f32.mrb[0].mxu0
        %v1908 = vpop.f32.mrb[0].mxu0
        %v1909 = vadd.f32 0.0, %v1908
        %v1910 = vpop.f32.mrb[0].mxu0
        %1911 = vmatprep.mubr.bf16.mxu0 0
        %1912 = vmatmul.mubr.bf16.gmra.mrb[0].mxu0 %v1841
        %v1913 = vpop.f32.mrb[0].mxu0
        %v1914 = vadd.f32 0.0, %v1913
        %v1915 = vpop.f32.mrb[0].mxu0
        %v1916 = vpop.f32.mrb[0].mxu0
        %v1917 = vadd.f32 0.0, %v1916
        %v1918 = vpop.f32.mrb[0].mxu0
        %1919 = vmatprep.mubr.bf16.mxu0 0
        %1920 = vmatmul.mubr.bf16.gmra.mrb[0].mxu0 %v1844
        %v1921 = vpop.f32.mrb[0].mxu0
        %v1922 = vadd.f32 0.0, %v1921
        %v1923 = vpop.f32.mrb[0].mxu0
        %v1924 = vpop.f32.mrb[0].mxu0
        %v1925 = vadd.f32 0.0, %v1924
        %v1926 = vpop.f32.mrb[0].mxu0
        %1927 = vmatprep.mubr.bf16.mxu0 0
        %1928 = vmatmul.mubr.bf16.gmra.mrb[0].mxu0 %v1847
        %v1929 = vpop.f32.mrb[0].mxu0
        %v1930 = vadd.f32 0.0, %v1929
        %v1931 = vpop.f32.mrb[0].mxu0
        %v1932 = vpop.f32.mrb[0].mxu0
        %v1933 = vadd.f32 0.0, %v1932
        %v1934 = vpop.f32.mrb[0].mxu0
        %1935 = vmatprep.mubr.bf16.mxu0 0
        %1936 = vmatmul.mubr.bf16.gmra.mrb[0].mxu0 %v1850
        %v1937 = vpop.f32.mrb[0].mxu0
        %v1938 = vadd.f32 0.0, %v1937
        %v1939 = vpop.f32.mrb[0].mxu0
        %v1940 = vpop.f32.mrb[0].mxu0
        %v1941 = vadd.f32 0.0, %v1940
        %v1942 = vpop.f32.mrb[0].mxu0
        %1943 = vmatprep.mubr.bf16.mxu0 0
        %1944 = vmatmul.mubr.bf16.gmra.mrb[0].mxu0 %v1853
        %v1945 = vpop.f32.mrb[0].mxu0
        %v1946 = vadd.f32 0.0, %v1945
        %v1947 = vpop.f32.mrb[0].mxu0
        %v1948 = vpop.f32.mrb[0].mxu0
        %v1949 = vadd.f32 0.0, %v1948
        %v1950 = vpop.f32.mrb[0].mxu0
        %1951 = vdwg.mxu0
        %v1952 = vld [vmem:[%s10] sm:$0x1]
        %v1954 = vlaneseq
        %v1955 = vshrl.u32 %v1954, 7
        %v1956 = vsub.s32 0, %v1955
        %v1957 = vrot.slane %v1952, %v1956
        %v1959 = vmul.f32 %v1890, %v1957
        %v1960 = vmul.f32 %v1893, %v1957
        %v1961 = vmul.f32 %v1898, %v1957
        %v1962 = vmul.f32 %v1901, %v1957
        %v1963 = vmul.f32 %v1906, %v1957
        %v1964 = vmul.f32 %v1909, %v1957
        %v1965 = vmul.f32 %v1914, %v1957
        %v1966 = vmul.f32 %v1917, %v1957
        %v1967 = vmul.f32 %v1922, %v1957
        %v1968 = vmul.f32 %v1925, %v1957
        %v1969 = vmul.f32 %v1930, %v1957
        %v1970 = vmul.f32 %v1933, %v1957
        %v1971 = vmul.f32 %v1938, %v1957
        %v1972 = vmul.f32 %v1941, %v1957
        %v1973 = vmul.f32 %v1946, %v1957
        %v1974 = vmul.f32 %v1949, %v1957
        %v1975 = vld [vmem:[%s11] sm:$0x1]
        %v1977 = vlaneseq
        %v1978 = vshrl.u32 %v1977, 7
        %v1979 = vsub.s32 0, %v1978
        %v1980 = vrot.slane %v1975, %v1979
        %v1982 = vadd.f32 %v1959, %v1980
        %v1983 = vadd.f32 %v1960, %v1980
        %v1984 = vadd.f32 %v1961, %v1980
        %v1985 = vadd.f32 %v1962, %v1980
        %v1986 = vadd.f32 %v1963, %v1980
        %v1987 = vadd.f32 %v1964, %v1980
        %v1988 = vadd.f32 %v1965, %v1980
        %v1989 = vadd.f32 %v1966, %v1980
        %v1990 = vadd.f32 %v1967, %v1980
        %v1991 = vadd.f32 %v1968, %v1980
        %v1992 = vadd.f32 %v1969, %v1980
        %v1993 = vadd.f32 %v1970, %v1980
        %v1994 = vadd.f32 %v1971, %v1980
        %v1995 = vadd.f32 %v1972, %v1980
        %v1996 = vadd.f32 %v1973, %v1980
        %v1997 = vadd.f32 %v1974, %v1980
        %v1998 = vunpack.c.l.bf16 %v567
        %v1999 = vunpack.c.l.bf16 %v568
        %v2000 = vunpack.c.l.bf16 %v569
        %v2001 = vunpack.c.l.bf16 %v570
        %v2002 = vunpack.c.l.bf16 %v571
        %v2003 = vunpack.c.l.bf16 %v572
        %v2004 = vunpack.c.l.bf16 %v573
        %v2005 = vunpack.c.l.bf16 %v574
        %v2006 = vunpack.c.l.bf16 %v575
        %v2007 = vunpack.c.l.bf16 %v576
        %v2008 = vunpack.c.l.bf16 %v577
        %v2009 = vunpack.c.l.bf16 %v578
        %v2010 = vunpack.c.l.bf16 %v579
        %v2011 = vunpack.c.l.bf16 %v580
        %v2012 = vunpack.c.l.bf16 %v581
        %v2013 = vunpack.c.l.bf16 %v582
        %v2014 = vadd.f32 %v1982, %v1998
        %v2015 = vadd.f32 %v1983, %v1999
        %v2016 = vadd.f32 %v1984, %v2000
        %v2017 = vadd.f32 %v1985, %v2001
        %v2018 = vadd.f32 %v1986, %v2002
        %v2019 = vadd.f32 %v1987, %v2003
        %v2020 = vadd.f32 %v1988, %v2004
        %v2021 = vadd.f32 %v1989, %v2005
        %v2022 = vadd.f32 %v1990, %v2006
        %v2023 = vadd.f32 %v1991, %v2007
        %v2024 = vadd.f32 %v1992, %v2008
        %v2025 = vadd.f32 %v1993, %v2009
        %v2026 = vadd.f32 %v1994, %v2010
        %v2027 = vadd.f32 %v1995, %v2011
        %v2028 = vadd.f32 %v1996, %v2012
        %v2029 = vadd.f32 %v1997, %v2013
        %v2030 = vmax.f32 %v2014, 0.0
        %v2031 = vmax.f32 %v2015, 0.0
        %v2032 = vmax.f32 %v2016, 0.0
        %v2033 = vmax.f32 %v2017, 0.0
        %v2034 = vmax.f32 %v2018, 0.0
        %v2035 = vmax.f32 %v2019, 0.0
        %v2036 = vmax.f32 %v2020, 0.0
        %v2037 = vmax.f32 %v2021, 0.0
        %v2038 = vmax.f32 %v2022, 0.0
        %v2039 = vmax.f32 %v2023, 0.0
        %v2040 = vmax.f32 %v2024, 0.0
        %v2041 = vmax.f32 %v2025, 0.0
        %v2042 = vmax.f32 %v2026, 0.0
        %v2043 = vmax.f32 %v2027, 0.0
        %v2044 = vmax.f32 %v2028, 0.0
        %v2045 = vmax.f32 %v2029, 0.0
        %2046 = vst [vmem:[%s545] sm:$0xff] %v2030
        %2047 = vst [vmem:[%s545 + $0x8] sm:$0xff] %v2031
        %2048 = vst [vmem:[%s545 + $0x10] sm:$0xff] %v2032
        %2049 = vst [vmem:[%s545 + $0x18] sm:$0xff] %v2033
        %2050 = vst [vmem:[%s545 + $0x20] sm:$0xff] %v2034
        %2051 = vst [vmem:[%s545 + $0x28] sm:$0xff] %v2035
        %2052 = vst [vmem:[%s545 + $0x30] sm:$0xff] %v2036
        %2053 = vst [vmem:[%s545 + $0x38] sm:$0xff] %v2037
        %2054 = vst [vmem:[%s545 + $0x40] sm:$0xff] %v2038
        %2055 = vst [vmem:[%s545 + $0x48] sm:$0xff] %v2039
        %2056 = vst [vmem:[%s545 + $0x50] sm:$0xff] %v2040
        %2057 = vst [vmem:[%s545 + $0x58] sm:$0xff] %v2041
        %2058 = vst [vmem:[%s545 + $0x60] sm:$0xff] %v2042
        %2059 = vst [vmem:[%s545 + $0x68] sm:$0xff] %v2043
        %2060 = vst [vmem:[%s545 + $0x70] sm:$0xff] %v2044
        %2061 = vst [vmem:[%s545 + $0x78] sm:$0xff] %v2045
        %s2062 = sand.u32 %s343, 1
        %s2063 = scalar_lea.sflag [#allocation4], %s2062
        %s2064 = sand.u32 %s343, 1
        %s2065 = smul.addr %s2064, 128
        %s2066 = scalar_lea.vmem [#allocation7], %s2065
        // Predicated region
        $region77: #{tpu_custom_call.1} parent=67 // pred_check
          %p2067 = pneg %p353
        $region78: #{tpu_custom_call.1} parent=67 // pred_check_branch
          %2069 = sbr.rel (%p2067) target = $region80
        $region79: #{tpu_custom_call.1} parent=67 // pred_region
          %s2070 = smul.u32 8, %s37
          %s2072 = ssub.s32 2048, 2048
          %2073 = vsyncadd %s2063, %s2072
          %s2074 = smul.addr %s2070, 2
          %s2075 = smul.addr %s36, 32
          %s2076 = sadd.s32 %s2074, %s2075
          %s2077 = smul.addr %s2076, 128
          %s2078 = scalar_lea.hbm %s12, %s2077
          %s2079 = sshll.u32 %s2066, 4
          %s2080 = int_to_ptr.vmem [resolvable:$true] %s2079
          %2085 = dma.vmem_to_hbm [thread:$0]  %s2080, 2048, %s2078, %s2063, 128, 128, 8
        $region80: #{tpu_custom_call.1} parent=67 // pred_fallthru
          _
      $region68: #{tpu_custom_call.1} parent=5 // pred_fallthru
        _
      %p2086 = scmp.le.s32.totalorder 2, %s27
      // Predicated region
      $region81: #{tpu_custom_call.1} parent=5 // pred_check
        %p2087 = pneg %p2086
      $region82: #{tpu_custom_call.1} parent=5 // pred_check_branch
        %2089 = sbr.rel (%p2087) target = $region84
      $region83: #{tpu_custom_call.1} parent=5 // pred_region
        %s2090 = ssub.s32 %s27, 2
        // Predicated region
        $region85: #{tpu_custom_call.1} parent=83 // pred_check
          %p2091 = pneg %p359
        $region86: #{tpu_custom_call.1} parent=83 // pred_check_branch
          %2093 = sbr.rel (%p2091) target = $region88
        $region87: #{tpu_custom_call.1} parent=83 // pred_region
          %s2094 = sand.u32 %s344, 1
          %s2095 = scalar_lea.sflag [#allocation4], %s2094
          %s2096 = sand.u32 %s344, 1
          %s2097 = smul.addr %s2096, 128
          %s2098 = scalar_lea.vmem [#allocation7], %s2097
          %2099 = dma.done %s2095, 2048
        $region88: #{tpu_custom_call.1} parent=83 // pred_fallthru
          _
      $region84: #{tpu_custom_call.1} parent=5 // pred_fallthru
        _
    $region6: #{tpu_custom_call.1} parent=1 // loop_footer
      %s31 = sadd.s32 1, %s27
    $region7: #{tpu_custom_call.1} parent=1 // loop_footer_branch
      %26 = sbr.rel target = $region3
    $region8: #{tpu_custom_call.1} parent=1 // loop_exit
      _
    %2100 = vsyncpa [#allocation3], 1
    %s2101 = scalar_lea.sflag [#allocation3], 1
    %2102 = vsyncpa %s2101, 1
    %2103 = vsyncpa [#allocation6], 1
    %s2104 = scalar_lea.sflag [#allocation6], 1
    %2105 = vsyncpa %s2104, 1
    %2106 = vsyncpa [#allocation4], 1
    %s2107 = scalar_lea.sflag [#allocation4], 1
    %2108 = vsyncpa %s2107, 1

</llo_original>
